<compile_context>
chip_gen: v7x
topology: tpu7x:2x2x1
jax: 0.10.0
libtpu: 0.0.40
codegen_flags: <defaults>
</compile_context>

<pallas_src>
import functools
import warnings

import jax
import jax.numpy as jnp
import numpy as np
from jax.experimental import pallas as pl
from jax.experimental.pallas import tpu as pltpu


def _pick_tile(n, requested, multiple):
    """Largest tile <= requested that divides n and is a multiple of `multiple`.

    Falls back to the full dimension (always a legal TPU block size).
    """
    t = min(requested, n)
    t -= t % multiple
    while t >= multiple:
        if n % t == 0:
            return t
        t -= multiple
    return n


def _pad_to_multiple(arr, axis, multiple):
    size = arr.shape[axis]
    pad = (-size) % multiple
    if pad == 0:
        return arr
    cfg = [(0, 0)] * arr.ndim
    cfg[axis] = (0, pad)
    return jnp.pad(arr, cfg)


def _tpu_generation():
    try:
        kind = jax.devices()[0].device_kind.lower()
    except Exception:
        return "unknown"
    if "v6" in kind:
        return "v6"
    if "v5" in kind:
        return "v5"
    if "v7" in kind or "7x" in kind:
        return "v7"
    return "unknown"


# Per-generation defaults:
#   (row_tile, nbr_tile, vmem_limit_bytes, elementwise dtype, W buffer count)
#   v5e : 128 MiB VMEM, lowest HBM BW -> big tiles, high VMEM budget; no bf16
#         VPU so elementwise stays f32.  Bump the W buffer count to 3
#         (pl.Buffered) only if the W-read DMA is still exposed after the
#         bf16-input change.
#   v6e : 128 MiB VMEM, bf16 VALU -> big tiles + bf16 elementwise.
#   v7x : 64 MiB physical VMEM -> halve the row tile (keep TJ=128 for A's
#         lane axis), bf16 elementwise halves intermediate footprint.
_GEN_DEFAULTS = {
    "v5":      (256, 256, 100 * 1024 * 1024, jnp.float32, 2),
    "v6":      (256, 256, 100 * 1024 * 1024, jnp.bfloat16, 2),
    "v7":      (64, 128, 48 * 1024 * 1024, jnp.bfloat16, 2),
    "unknown": (128, 128, 48 * 1024 * 1024, jnp.float32, 2),
}


def _gnn_layer_kernel(
    a_ref, w_ref, xproj_ref, x1_ref, invdeg_ref,
    we1e_ref, be1_ref, we2_ref, be2_ref,
    wnew_ref, xnew_ref,
    *, compute_dtype, ew_dtype,
):
    j = pl.program_id(2)              # neighbor-tile index (reduction axis)
    nj = pl.num_programs(2)

    a_t = a_ref[0].astype(ew_dtype)   # (TI, TJ)   unnormalized adjacency tile
    w_t = w_ref[0]                    # (TI, TJ, Fe) edge features, compute_dtype
    xp_j = xproj_ref[0].astype(ew_dtype)   # (TJ, He)   x @ We1[Fe:]  (hoisted)
    x1_j = x1_ref[0].astype(ew_dtype)      # (TJ, Fout) node-MLP(x)   (hoisted)

    ti, tj, fe = w_t.shape
    he = xp_j.shape[-1]
    fout = x1_j.shape[-1]

    # ---- edge MLP, layer 1 (fused concat) ----------------------------------
    # concat([W, A[...,None]*x_j], -1) @ We1
    #   == W @ We1[:Fe]  +  A[...,None] * (x_j @ We1[Fe:])
    h = jnp.dot(w_t.reshape(ti * tj, fe), we1e_ref[...],
                preferred_element_type=jnp.float32)            # (TI*TJ, He) f32
    h = h.reshape(ti, tj, he).astype(ew_dtype)
    h = jnp.maximum(h + a_t[:, :, None] * xp_j[None, :, :] + be1_ref[...], 0.0)

    # ---- edge MLP, layer 2 --------------------------------------------------
    w_new = jnp.dot(h.reshape(ti * tj, he).astype(compute_dtype), we2_ref[...],
                    preferred_element_type=jnp.float32)         # (TI*TJ, Fout) f32
    w_new = jnp.maximum(
        w_new.astype(ew_dtype).reshape(ti, tj, fout) + be2_ref[...], 0.0)
    wnew_ref[0] = w_new.astype(wnew_ref.dtype)

    # ---- unnormalized aggregation over this neighbor tile -------------------
    # Row L1 normalization (inv_deg) is applied once on the last tile below.
    prod = a_t[:, :, None] * (w_new * x1_j[None, :, :])          # ew_dtype
    contrib = jnp.sum(prod.astype(jnp.float32), axis=1)          # (TI, Fout) f32

    @pl.when(j == 0)
    def _first():
        xnew_ref[0] = contrib.astype(xnew_ref.dtype)

    @pl.when(j > 0)
    def _accumulate():
        xnew_ref[0] += contrib.astype(xnew_ref.dtype)

    @pl.when(j == nj - 1)
    def _finalize():
        xnew_ref[0] = xnew_ref[0] * invdeg_ref[0]


def gnn_layer_forward(A, W, x, params, *, norm=True,
                      row_tile=None, nbr_tile=None,
                      compute_dtype=jnp.bfloat16,
                      elementwise_dtype=None,
                      wnew_dtype=jnp.bfloat16,
                      pad_feature_lanes=True,
                      vmem_limit_bytes=None,
                      w_buffer_count=None,
                      interpret=False):
    """Pallas forward of GNNLayer (sk_channel=False). Returns (W_new, x_new)."""
    B, N, _ = A.shape
    Fe = W.shape[-1]
    Fn = x.shape[-1]

    we1, be1 = params["we1"], params["be1"]
    we2, be2 = params["we2"], params["be2"]
    wn1, bn1 = params["wn1"], params["bn1"]
    wn2, bn2 = params["wn2"], params["bn2"]

    assert we1.shape[0] == Fe + Fn, "e_func layer-0 expects (in_edge + in_node) rows"
    Fout = we2.shape[1]
    assert wn2.shape[1] == Fout, "sk_channel=False requires out_nfeat == out_efeat"

    gen = _tpu_generation()
    d_row, d_nbr, d_vmem, d_ew, d_buf = _GEN_DEFAULTS[gen]
    row_tile = d_row if row_tile is None else row_tile
    nbr_tile = d_nbr if nbr_tile is None else nbr_tile
    vmem_limit_bytes = d_vmem if vmem_limit_bytes is None else vmem_limit_bytes
    ew_dtype = d_ew if elementwise_dtype is None else elementwise_dtype
    w_buffer_count = d_buf if w_buffer_count is None else w_buffer_count

    # ---- (b, j)-only work hoisted out of the grid (tiny one-shot XLA matmuls)
    we1_e = we1[:Fe]                  # acts on W            (Fe, He)
    we1_n = we1[Fe:]                  # acts on A[...]*x[j]  (Fn, He)
    x_f32 = x.astype(jnp.float32)
    x_proj = x_f32 @ we1_n.astype(jnp.float32)                 # (B, N, He)
    x1 = jax.nn.relu(x_f32 @ wn1 + bn1)
    x1 = jax.nn.relu(x1 @ wn2 + bn2)                           # (B, N, Fout)

    # Row-degree normalization (F.normalize(A, p=1, dim=2)); factored out of
    # the j-reduction and applied once to the accumulated x_new in-kernel.
    if norm:
        inv_deg = 1.0 / jnp.maximum(
            jnp.sum(jnp.abs(A), axis=2, keepdims=True), 1e-12)
    else:
        inv_deg = jnp.ones((B, N, 1), jnp.float32)
    inv_deg = inv_deg.astype(jnp.float32)

    # ---- lane-dense (128-padded) feature dims + bf16 HBM streams ------------
    lane = 128 if pad_feature_lanes else 1
    W_s = _pad_to_multiple(W, -1, lane).astype(compute_dtype)      # big stream
    Fe_p = W_s.shape[-1]
    we1_e_s = _pad_to_multiple(_pad_to_multiple(we1_e, 0, lane), 1, lane)
    we1_e_s = we1_e_s.astype(compute_dtype)
    He_p = we1_e_s.shape[1]
    we2_s = _pad_to_multiple(_pad_to_multiple(we2, 0, lane), 1, lane)
    we2_s = we2_s.astype(compute_dtype)
    Fo_p = we2_s.shape[1]
    be1_s = _pad_to_multiple(be1, 1, lane).astype(ew_dtype)
    be2_s = _pad_to_multiple(be2, 1, lane).astype(ew_dtype)
    xp_s = _pad_to_multiple(x_proj, -1, lane).astype(ew_dtype)
    x1_s = _pad_to_multiple(x1, -1, lane).astype(ew_dtype)
    A_s = A.astype(ew_dtype)          # exact for a 0/1 adjacency matrix

    # Tile sizes: row tile on sublanes (multiple of 8), neighbor tile on the
    # lane axis of A (multiple of 128).  Full-dim fallback for small N.
    TI = _pick_tile(N, row_tile, 8)
    TJ = _pick_tile(N, nbr_tile, 128)
    if TJ == N and N > max(nbr_tile, 128):
        warnings.warn(
            "gnn_layer_forward: no 128-aligned divisor of N=%d <= %d; the "
            "neighbor tile fell back to the full dimension and may exceed "
            "VMEM for large N." % (N, nbr_tile))
    grid = (B, N // TI, N // TJ)

    def const_spec(arr):
        nd = arr.ndim
        return pl.BlockSpec(arr.shape, lambda b, i, j, _nd=nd: (0,) * _nd)

    def w_spec():
        shape = (1, TI, TJ, Fe_p)
        imap = lambda b, i, j: (b, i, j, 0)
        if w_buffer_count and w_buffer_count != 2:
            try:   # deeper pipelining of the W stream (v5e knob); safe fallback
                return pl.BlockSpec(shape, imap,
                                    pipeline_mode=pl.Buffered(w_buffer_count))
            except TypeError:
                pass
        return pl.BlockSpec(shape, imap)

    in_specs = [
        pl.BlockSpec((1, TI, TJ), lambda b, i, j: (b, i, j)),        # A
        w_spec(),                                                    # W (bf16)
        pl.BlockSpec((1, TJ, He_p), lambda b, i, j: (b, j, 0)),      # x @ We1[Fe:]
        pl.BlockSpec((1, TJ, Fo_p), lambda b, i, j: (b, j, 0)),      # node-MLP(x)
        pl.BlockSpec((1, TI, 1), lambda b, i, j: (b, i, 0)),         # 1 / row degree
        const_spec(we1_e_s), const_spec(be1_s),                      # resident weights
        const_spec(we2_s), const_spec(be2_s),
    ]
    out_specs = [
        pl.BlockSpec((1, TI, TJ, Fo_p), lambda b, i, j: (b, i, j, 0)),  # W_new
        pl.BlockSpec((1, TI, Fo_p), lambda b, i, j: (b, i, 0)),         # x_new (resident over j)
    ]
    out_shape = [
        jax.ShapeDtypeStruct((B, N, N, Fo_p), wnew_dtype),
        jax.ShapeDtypeStruct((B, N, Fo_p), jnp.float32),
    ]

    # Advisory cost so XLA schedules sensibly around the custom call.
    isz = lambda dt: np.dtype(dt).itemsize
    flops = (2 * B * N * N * (Fe_p * He_p + He_p * Fo_p)
             + 8 * B * N * N * max(He_p, Fo_p))
    bytes_accessed = (
        B * N * N * Fe_p * isz(compute_dtype)                 # W read
        + B * N * N * isz(A_s.dtype)                          # A read
        + B * N * N * Fo_p * isz(wnew_dtype)                  # W_new write
        + (N // TI) * B * N * (He_p + Fo_p) * isz(ew_dtype)   # x_proj/x1 re-reads
        + B * N * Fo_p * 4                                    # x_new write
    )
    cost = pl.CostEstimate(flops=int(flops), transcendentals=0,
                           bytes_accessed=int(bytes_accessed))

    kernel = functools.partial(_gnn_layer_kernel,
                               compute_dtype=compute_dtype,
                               ew_dtype=ew_dtype)

    w_new, x_new = pl.pallas_call(
        kernel,
        out_shape=out_shape,
        grid_spec=pltpu.PrefetchScalarGridSpec(
            num_scalar_prefetch=0,
            grid=grid,
            in_specs=in_specs,
            out_specs=out_specs,
        ),
        compiler_params=pltpu.CompilerParams(
            # batch / row tiles shard across v7x's two TensorCores; the
            # neighbor axis is the on-chip reduction (sequential).
            dimension_semantics=("parallel", "parallel", "arbitrary"),
            vmem_limit_bytes=vmem_limit_bytes,
        ),
        cost_estimate=cost,
        interpret=interpret,
    )(A_s, W_s, xp_s, x1_s, inv_deg,
      we1_e_s, be1_s, we2_s, be2_s)

    if Fo_p != Fout:        # drop the zero-padded lanes
        w_new = w_new[..., :Fout]
        x_new = x_new[..., :Fout]
    return w_new, x_new


def gnn_layer_reference(A, W, x, params, norm=True):
    """Pure-JAX f32 reference matching the PyTorch forward."""
    W1 = A[..., None] * x[:, None, :, :]
    W2 = jnp.concatenate([W, W1], axis=-1)
    h = jax.nn.relu(W2 @ params["we1"] + params["be1"])
    W_new = jax.nn.relu(h @ params["we2"] + params["be2"])
    A_n = A
    if norm:
        A_n = A / jnp.maximum(jnp.sum(jnp.abs(A), axis=2, keepdims=True), 1e-12)
    x1 = jax.nn.relu(
        jax.nn.relu(x @ params["wn1"] + params["bn1"]) @ params["wn2"]
        + params["bn2"])
    x_new = jnp.sum(A_n[..., None] * W_new * x1[:, None, :, :], axis=2)
    return W_new, x_new


def init_gnn_params(key, *, in_node, in_edge, out_feat):
    """Weights are (in_features, out_features) = nn.Linear.weight.T; biases (1, out)."""
    def linear(k, fin, fout):
        kw, kb = jax.random.split(k)
        bound = 1.0 / jnp.sqrt(jnp.float32(fin))
        w = jax.random.uniform(kw, (fin, fout), jnp.float32, -bound, bound)
        b = jax.random.uniform(kb, (1, fout), jnp.float32, -bound, bound)
        return w, b

    k1, k2, k3, k4 = jax.random.split(key, 4)
    we1, be1 = linear(k1, in_edge + in_node, out_feat)   # e_func[0]
    we2, be2 = linear(k2, out_feat, out_feat)            # e_func[2]
    wn1, bn1 = linear(k3, in_node, out_feat)             # n_func[0]
    wn2, bn2 = linear(k4, out_feat, out_feat)            # n_func[2]
    return dict(we1=we1, be1=be1, we2=we2, be2=be2,
                wn1=wn1, bn1=bn1, wn2=wn2, bn2=bn2)


if __name__ == "__main__":
    B, N = 2, 16
    Fe, Fn = 8, 8          # in_edge_features, in_node_features
    Fout = 16              # out_edge_features == out_node_features (sk_channel=False)

    key = jax.random.PRNGKey(0)
    ks = jax.random.split(key, 4)

    A = (jax.random.uniform(ks[0], (B, N, N)) > 0.5).astype(jnp.float32)
    W = 0.5 * jax.random.normal(ks[1], (B, N, N, Fe), jnp.float32)
    x = 0.5 * jax.random.normal(ks[2], (B, N, Fn), jnp.float32)

    params = init_gnn_params(ks[3], in_node=Fn, in_edge=Fe, out_feat=Fout)

    W_new, x_new = gnn_layer_forward(A, W, x, params, norm=True)
    jax.block_until_ready((W_new, x_new))

    # Pure-JAX f32 reference check (kernel uses bf16 streams / MXU inputs and
    # bf16 W_new writeback -> loose tolerance).
    W_ref, x_ref = gnn_layer_reference(A, W, x, params, norm=True)
    np.testing.assert_allclose(np.asarray(W_new).astype(np.float32),
                               np.asarray(W_ref), rtol=5e-2, atol=5e-2)
    np.testing.assert_allclose(np.asarray(x_new).astype(np.float32),
                               np.asarray(x_ref), rtol=5e-2, atol=5e-2)

    print("KERNEL_OK")
</pallas_src>

<mosaic_0001>
module attributes {stable_mosaic.version = 11 : i64} {
  func.func @_gnn_layer_kernel(%arg0: i32, %arg1: i32, %arg2: i32, %arg3: memref<1x16x16xf32, #tpu.memory_space<vmem>>, %arg4: memref<1x16x16x128xbf16, #tpu.memory_space<vmem>>, %arg5: memref<1x16x128xf32, #tpu.memory_space<vmem>>, %arg6: memref<1x16x128xf32, #tpu.memory_space<vmem>>, %arg7: memref<1x16x1xf32, #tpu.memory_space<vmem>>, %arg8: memref<128x128xbf16, #tpu.memory_space<vmem>>, %arg9: memref<1x128xf32, #tpu.memory_space<vmem>>, %arg10: memref<128x128xbf16, #tpu.memory_space<vmem>>, %arg11: memref<1x128xf32, #tpu.memory_space<vmem>>, %arg12: memref<1x16x16x128xbf16, #tpu.memory_space<vmem>>, %arg13: memref<1x16x128xf32, #tpu.memory_space<vmem>>) attributes {dimension_semantics = [#tpu.dimension_semantics<parallel>, #tpu.dimension_semantics<parallel>, #tpu.dimension_semantics<arbitrary>], iteration_bounds = array<i64: 2, 1, 1>, scalar_prefetch = 0 : i64, scratch_operands = 0 : i64, tpu.core_type = #tpu.core_type<tc>, window_params = [{transform_indices = @transform_0, window_bounds = array<i64: 1, 16, 16>}, {transform_indices = @transform_1, window_bounds = array<i64: 1, 16, 16, 128>}, {transform_indices = @transform_2, window_bounds = array<i64: 1, 16, 128>}, {transform_indices = @transform_3, window_bounds = array<i64: 1, 16, 128>}, {transform_indices = @transform_4, window_bounds = array<i64: 1, 16, 1>}, {pipeline_mode = #tpu.pipeline_mode<synchronous>, transform_indices = @transform_5, window_bounds = array<i64: 128, 128>}, {pipeline_mode = #tpu.pipeline_mode<synchronous>, transform_indices = @transform_6, window_bounds = array<i64: 1, 128>}, {pipeline_mode = #tpu.pipeline_mode<synchronous>, transform_indices = @transform_7, window_bounds = array<i64: 128, 128>}, {pipeline_mode = #tpu.pipeline_mode<synchronous>, transform_indices = @transform_8, window_bounds = array<i64: 1, 128>}, {transform_indices = @transform_9, window_bounds = array<i64: 1, 16, 16, 128>}, {transform_indices = @transform_10, window_bounds = array<i64: 1, 16, 128>}]} {
    %c0 = arith.constant 0 : index
    %c0_0 = arith.constant 0 : index
    %c0_1 = arith.constant 0 : index
    %0 = vector.load %arg3[%c0, %c0_0, %c0_1] : memref<1x16x16xf32, #tpu.memory_space<vmem>>, vector<1x16x16xf32>
    %1 = vector.shape_cast %0 : vector<1x16x16xf32> to vector<16x16xf32>
    %c0_2 = arith.constant 0 : index
    %c0_3 = arith.constant 0 : index
    %c0_4 = arith.constant 0 : index
    %c0_5 = arith.constant 0 : index
    %2 = vector.load %arg4[%c0_2, %c0_3, %c0_4, %c0_5] : memref<1x16x16x128xbf16, #tpu.memory_space<vmem>>, vector<1x16x16x128xbf16>
    %3 = vector.shape_cast %2 : vector<1x16x16x128xbf16> to vector<16x16x128xbf16>
    %c0_6 = arith.constant 0 : index
    %c0_7 = arith.constant 0 : index
    %c0_8 = arith.constant 0 : index
    %4 = vector.load %arg5[%c0_6, %c0_7, %c0_8] : memref<1x16x128xf32, #tpu.memory_space<vmem>>, vector<1x16x128xf32>
    %5 = vector.shape_cast %4 : vector<1x16x128xf32> to vector<16x128xf32>
    %c0_9 = arith.constant 0 : index
    %c0_10 = arith.constant 0 : index
    %c0_11 = arith.constant 0 : index
    %6 = vector.load %arg6[%c0_9, %c0_10, %c0_11] : memref<1x16x128xf32, #tpu.memory_space<vmem>>, vector<1x16x128xf32>
    %7 = vector.shape_cast %6 : vector<1x16x128xf32> to vector<16x128xf32>
    %8 = vector.shape_cast %3 : vector<16x16x128xbf16> to vector<256x128xbf16>
    %c0_12 = arith.constant 0 : index
    %c0_13 = arith.constant 0 : index
    %9 = vector.load %arg8[%c0_12, %c0_13] : memref<128x128xbf16, #tpu.memory_space<vmem>>, vector<128x128xbf16>
    %cst = arith.constant dense<0.000000e+00> : vector<256x128xf32>
    %10 = tpu.matmul %8, %9, %cst {dimension_numbers = #tpu.dot_dimension_numbers<[1], [0], [0], [1], [0, 0, 1, 1], [], []>} : vector<256x128xbf16>, vector<128x128xbf16>, vector<256x128xf32> -> vector<256x128xf32>
    %11 = vector.shape_cast %10 : vector<256x128xf32> to vector<16x16x128xf32>
    %12 = vector.shape_cast %1 : vector<16x16xf32> to vector<16x16x1xf32>
    %13 = vector.shape_cast %5 : vector<16x128xf32> to vector<1x16x128xf32>
    %14 = vector.broadcast %12 : vector<16x16x1xf32> to vector<16x16x128xf32>
    %15 = vector.broadcast %13 : vector<1x16x128xf32> to vector<16x16x128xf32>
    %16 = arith.mulf %14, %15 : vector<16x16x128xf32>
    %17 = arith.addf %11, %16 : vector<16x16x128xf32>
    %c0_14 = arith.constant 0 : index
    %c0_15 = arith.constant 0 : index
    %18 = vector.load %arg9[%c0_14, %c0_15] : memref<1x128xf32, #tpu.memory_space<vmem>>, vector<1x128xf32>
    %19 = vector.shape_cast %18 : vector<1x128xf32> to vector<1x1x128xf32>
    %20 = vector.broadcast %19 : vector<1x1x128xf32> to vector<16x16x128xf32>
    %21 = arith.addf %17, %20 : vector<16x16x128xf32>
    %cst_16 = arith.constant 0.000000e+00 : f32
    %22 = vector.broadcast %cst_16 : f32 to vector<16x16x128xf32>
    %23 = arith.maximumf %21, %22 : vector<16x16x128xf32>
    %24 = vector.shape_cast %23 : vector<16x16x128xf32> to vector<256x128xf32>
    %25 = arith.truncf %24 : vector<256x128xf32> to vector<256x128xbf16>
    %c0_17 = arith.constant 0 : index
    %c0_18 = arith.constant 0 : index
    %26 = vector.load %arg10[%c0_17, %c0_18] : memref<128x128xbf16, #tpu.memory_space<vmem>>, vector<128x128xbf16>
    %cst_19 = arith.constant dense<0.000000e+00> : vector<256x128xf32>
    %27 = tpu.matmul %25, %26, %cst_19 {dimension_numbers = #tpu.dot_dimension_numbers<[1], [0], [0], [1], [0, 0, 1, 1], [], []>} : vector<256x128xbf16>, vector<128x128xbf16>, vector<256x128xf32> -> vector<256x128xf32>
    %28 = vector.shape_cast %27 : vector<256x128xf32> to vector<16x16x128xf32>
    %c0_20 = arith.constant 0 : index
    %c0_21 = arith.constant 0 : index
    %29 = vector.load %arg11[%c0_20, %c0_21] : memref<1x128xf32, #tpu.memory_space<vmem>>, vector<1x128xf32>
    %30 = vector.shape_cast %29 : vector<1x128xf32> to vector<1x1x128xf32>
    %31 = vector.broadcast %30 : vector<1x1x128xf32> to vector<16x16x128xf32>
    %32 = arith.addf %28, %31 : vector<16x16x128xf32>
    %cst_22 = arith.constant 0.000000e+00 : f32
    %33 = vector.broadcast %cst_22 : f32 to vector<16x16x128xf32>
    %34 = arith.maximumf %32, %33 : vector<16x16x128xf32>
    %35 = arith.truncf %34 : vector<16x16x128xf32> to vector<16x16x128xbf16>
    %c0_23 = arith.constant 0 : index
    %c0_24 = arith.constant 0 : index
    %c0_25 = arith.constant 0 : index
    %c0_26 = arith.constant 0 : index
    %36 = vector.load %arg12[%c0_23, %c0_24, %c0_25, %c0_26] : memref<1x16x16x128xbf16, #tpu.memory_space<vmem>>, vector<1x16x16x128xbf16>
    %37 = vector.shape_cast %36 : vector<1x16x16x128xbf16> to vector<16x16x128xbf16>
    %38 = vector.shape_cast %35 : vector<16x16x128xbf16> to vector<1x16x16x128xbf16>
    tpu.vector_store %arg12[%c0_23, %c0_24, %c0_25, %c0_26], %38 {strides = array<i32>} : memref<1x16x16x128xbf16, #tpu.memory_space<vmem>>, vector<1x16x16x128xbf16>,
    %39 = vector.shape_cast %1 : vector<16x16xf32> to vector<16x16x1xf32>
    %40 = vector.shape_cast %7 : vector<16x128xf32> to vector<1x16x128xf32>
    %41 = vector.broadcast %40 : vector<1x16x128xf32> to vector<16x16x128xf32>
    %42 = arith.mulf %34, %41 : vector<16x16x128xf32>
    %43 = vector.broadcast %39 : vector<16x16x1xf32> to vector<16x16x128xf32>
    %44 = arith.mulf %43, %42 : vector<16x16x128xf32>
    %cst_27 = arith.constant dense<0.000000e+00> : vector<16x128xf32>
    %45 = vector.multi_reduction <add>, %44, %cst_27 [1] : vector<16x16x128xf32> to vector<16x128xf32>
    %c0_i32 = arith.constant 0 : i32
    %46 = arith.cmpi eq, %arg2, %c0_i32 : i32
    %47 = arith.extui %46 : i1 to i32
    %c0_i32_28 = arith.constant 0 : i32
    %48 = arith.cmpi ne, %47, %c0_i32_28 : i32
    scf.if %48 {
      %c0_33 = arith.constant 0 : index
      %c0_34 = arith.constant 0 : index
      %c0_35 = arith.constant 0 : index
      %55 = vector.load %arg13[%c0_33, %c0_34, %c0_35] : memref<1x16x128xf32, #tpu.memory_space<vmem>>, vector<1x16x128xf32>
      %56 = vector.shape_cast %55 : vector<1x16x128xf32> to vector<16x128xf32>
      %57 = vector.shape_cast %45 : vector<16x128xf32> to vector<1x16x128xf32>
      tpu.vector_store %arg13[%c0_33, %c0_34, %c0_35], %57 {strides = array<i32>} : memref<1x16x128xf32, #tpu.memory_space<vmem>>, vector<1x16x128xf32>,
    } else {
    }
    %c0_i32_29 = arith.constant 0 : i32
    %49 = arith.cmpi sgt, %arg2, %c0_i32_29 : i32
    %50 = arith.extui %49 : i1 to i32
    %c0_i32_30 = arith.constant 0 : i32
    %51 = arith.cmpi ne, %50, %c0_i32_30 : i32
    scf.if %51 {
      %c0_33 = arith.constant 0 : index
      %c0_34 = arith.constant 0 : index
      %c0_35 = arith.constant 0 : index
      %55 = vector.load %arg13[%c0_33, %c0_34, %c0_35] : memref<1x16x128xf32, #tpu.memory_space<vmem>>, vector<1x16x128xf32>
      %56 = vector.shape_cast %55 : vector<1x16x128xf32> to vector<16x128xf32>
      %57 = arith.addf %56, %45 : vector<16x128xf32>
      %c0_36 = arith.constant 0 : index
      %c0_37 = arith.constant 0 : index
      %c0_38 = arith.constant 0 : index
      %58 = vector.load %arg13[%c0_36, %c0_37, %c0_38] : memref<1x16x128xf32, #tpu.memory_space<vmem>>, vector<1x16x128xf32>
      %59 = vector.shape_cast %58 : vector<1x16x128xf32> to vector<16x128xf32>
      %60 = vector.shape_cast %57 : vector<16x128xf32> to vector<1x16x128xf32>
      tpu.vector_store %arg13[%c0_36, %c0_37, %c0_38], %60 {strides = array<i32>} : memref<1x16x128xf32, #tpu.memory_space<vmem>>, vector<1x16x128xf32>,
    } else {
    }
    %c0_i32_31 = arith.constant 0 : i32
    %52 = arith.cmpi eq, %arg2, %c0_i32_31 : i32
    %53 = arith.extui %52 : i1 to i32
    %c0_i32_32 = arith.constant 0 : i32
    %54 = arith.cmpi ne, %53, %c0_i32_32 : i32
    scf.if %54 {
      %c0_33 = arith.constant 0 : index
      %c0_34 = arith.constant 0 : index
      %c0_35 = arith.constant 0 : index
      %55 = vector.load %arg13[%c0_33, %c0_34, %c0_35] : memref<1x16x128xf32, #tpu.memory_space<vmem>>, vector<1x16x128xf32>
      %56 = vector.shape_cast %55 : vector<1x16x128xf32> to vector<16x128xf32>
      %c0_36 = arith.constant 0 : index
      %c0_37 = arith.constant 0 : index
      %c0_38 = arith.constant 0 : index
      %57 = vector.load %arg7[%c0_36, %c0_37, %c0_38] : memref<1x16x1xf32, #tpu.memory_space<vmem>>, vector<1x16x1xf32>
      %58 = vector.shape_cast %57 : vector<1x16x1xf32> to vector<16x1xf32>
      %59 = vector.broadcast %58 : vector<16x1xf32> to vector<16x128xf32>
      %60 = arith.mulf %56, %59 : vector<16x128xf32>
      %c0_39 = arith.constant 0 : index
      %c0_40 = arith.constant 0 : index
      %c0_41 = arith.constant 0 : index
      %61 = vector.load %arg13[%c0_39, %c0_40, %c0_41] : memref<1x16x128xf32, #tpu.memory_space<vmem>>, vector<1x16x128xf32>
      %62 = vector.shape_cast %61 : vector<1x16x128xf32> to vector<16x128xf32>
      %63 = vector.shape_cast %60 : vector<16x128xf32> to vector<1x16x128xf32>
      tpu.vector_store %arg13[%c0_39, %c0_40, %c0_41], %63 {strides = array<i32>} : memref<1x16x128xf32, #tpu.memory_space<vmem>>, vector<1x16x128xf32>,
    } else {
    }
    return
  }
  func.func @transform_0(%arg0: i32, %arg1: i32, %arg2: i32) -> (i32, i32, i32) {
    %c0_i32 = arith.constant 0 : i32
    return %arg0, %arg1, %arg2 : i32, i32, i32
  }
  func.func @transform_1(%arg0: i32, %arg1: i32, %arg2: i32) -> (i32, i32, i32, i32) {
    %c0_i32 = arith.constant 0 : i32
    %c0_i32_0 = arith.constant 0 : i32
    return %arg0, %arg1, %arg2, %c0_i32 : i32, i32, i32, i32
  }
  func.func @transform_2(%arg0: i32, %arg1: i32, %arg2: i32) -> (i32, i32, i32) {
    %c0_i32 = arith.constant 0 : i32
    %c0_i32_0 = arith.constant 0 : i32
    return %arg0, %arg2, %c0_i32 : i32, i32, i32
  }
  func.func @transform_3(%arg0: i32, %arg1: i32, %arg2: i32) -> (i32, i32, i32) {
    %c0_i32 = arith.constant 0 : i32
    %c0_i32_0 = arith.constant 0 : i32
    return %arg0, %arg2, %c0_i32 : i32, i32, i32
  }
  func.func @transform_4(%arg0: i32, %arg1: i32, %arg2: i32) -> (i32, i32, i32) {
    %c0_i32 = arith.constant 0 : i32
    %c0_i32_0 = arith.constant 0 : i32
    return %arg0, %arg1, %c0_i32 : i32, i32, i32
  }
  func.func @transform_5(%arg0: i32, %arg1: i32, %arg2: i32) -> (i32, i32) {
    %c0_i32 = arith.constant 0 : i32
    %c0_i32_0 = arith.constant 0 : i32
    %c0_i32_1 = arith.constant 0 : i32
    return %c0_i32, %c0_i32_0 : i32, i32
  }
  func.func @transform_6(%arg0: i32, %arg1: i32, %arg2: i32) -> (i32, i32) {
    %c0_i32 = arith.constant 0 : i32
    %c0_i32_0 = arith.constant 0 : i32
    %c0_i32_1 = arith.constant 0 : i32
    return %c0_i32, %c0_i32_0 : i32, i32
  }
  func.func @transform_7(%arg0: i32, %arg1: i32, %arg2: i32) -> (i32, i32) {
    %c0_i32 = arith.constant 0 : i32
    %c0_i32_0 = arith.constant 0 : i32
    %c0_i32_1 = arith.constant 0 : i32
    return %c0_i32, %c0_i32_0 : i32, i32
  }
  func.func @transform_8(%arg0: i32, %arg1: i32, %arg2: i32) -> (i32, i32) {
    %c0_i32 = arith.constant 0 : i32
    %c0_i32_0 = arith.constant 0 : i32
    %c0_i32_1 = arith.constant 0 : i32
    return %c0_i32, %c0_i32_0 : i32, i32
  }
  func.func @transform_9(%arg0: i32, %arg1: i32, %arg2: i32) -> (i32, i32, i32, i32) {
    %c0_i32 = arith.constant 0 : i32
    %c0_i32_0 = arith.constant 0 : i32
    return %arg0, %arg1, %arg2, %c0_i32 : i32, i32, i32, i32
  }
  func.func @transform_10(%arg0: i32, %arg1: i32, %arg2: i32) -> (i32, i32, i32) {
    %c0_i32 = arith.constant 0 : i32
    %c0_i32_0 = arith.constant 0 : i32
    return %arg0, %arg1, %c0_i32 : i32, i32, i32
  }
}

</mosaic_0001>

<llo_original>
// kernel: tpu_custom_call.1
$region0: #{tpu_custom_call.1}
  #allocation0 [shape = 'u32[]', space=smem, size = 0x4, offset = 0x4, fixed_abs, tag = 'smem constant byte address 0x4 - core index']
  #allocation1 [shape = 'u32[144,128]{1,0:T(1,128)}', space=vmem, size = 0x12000, scoped, tag = 'internal scratch']
  %s0 = inlined_call_operand.vmem [shape: f32[2,16,16], index: 0, kind: input, shape index: {}]
  %s1 = inlined_call_operand.hbm [shape: bf16[2,16,16,128], index: 1, kind: input, shape index: {}]
  %s2 = inlined_call_operand.hbm [shape: f32[2,16,128], index: 2, kind: input, shape index: {}]
  %s3 = inlined_call_operand.hbm [shape: f32[2,16,128], index: 3, kind: input, shape index: {}]
  %s4 = inlined_call_operand.vmem [shape: f32[2,16,1], index: 4, kind: input, shape index: {}]
  %s5 = inlined_call_operand.hbm [shape: bf16[128,128], index: 5, kind: input, shape index: {}]
  %s6 = inlined_call_operand.vmem [shape: f32[1,128], index: 6, kind: input, shape index: {}]
  %s7 = inlined_call_operand.hbm [shape: bf16[128,128], index: 7, kind: input, shape index: {}]
  %s8 = inlined_call_operand.vmem [shape: f32[1,128], index: 8, kind: input, shape index: {}]
  %s9 = inlined_call_operand.hbm [shape: bf16[2,16,16,128], index: 9, kind: output, shape index: {0}]
  %s10 = inlined_call_operand.hbm [shape: f32[2,16,128], index: 10, kind: output, shape index: {1}]
  %11 = xla_tuple %s9, %s10
  %s12 = sld [smem:[#allocation0]]
  $region109: #{tpu_custom_call.1} parent=0
    _
  %s14 = ssub.s32 1, %s12
  %s15 = scalar_select 0, %s14, %s12
  $region1: #{tpu_custom_call.1} parent=0
    #allocation2 [shape = 'u8[131072]{0}', space=vmem, size = 0x20000, scoped, tag = 'input window, operand 1']
    #allocation3 [shape = 's32[2]{0}', space=sflag, size = 0x8, scoped, tag = 'scoped memory for tpu_custom_call.1']
    #allocation4 [shape = 's32[2]{0}', space=sflag, size = 0x8, scoped, tag = 'scoped memory for tpu_custom_call.1']
    #allocation5 [shape = 'u8[16384]{0}', space=vmem, size = 0x4000, scoped, tag = 'input window, operand 2']
    #allocation6 [shape = 's32[2]{0}', space=sflag, size = 0x8, scoped, tag = 'scoped memory for tpu_custom_call.1']
    #allocation7 [shape = 'u8[16384]{0}', space=vmem, size = 0x4000, scoped, tag = 'input window, operand 3']
    #allocation8 [shape = 'u8[32768]{0}', space=vmem, size = 0x8000, scoped, tag = 'input window, operand 5, single buffered']
    #allocation9 [shape = 's32[1]{0}', space=sflag, size = 0x4, scoped, tag = 'scoped memory for tpu_custom_call.1']
    #allocation10 [shape = 'u8[32768]{0}', space=vmem, size = 0x8000, scoped, tag = 'input window, operand 7, single buffered']
    #allocation11 [shape = 'u8[131072]{0}', space=vmem, size = 0x20000, scoped, tag = 'output window, operand 0']
    #allocation12 [shape = 'u8[16384]{0}', space=vmem, size = 0x4000, scoped, tag = 'output window, operand 1']
    #allocation13 [shape = 's32[2]{0}', space=sflag, size = 0x8, scoped, tag = 'scoped memory for tpu_custom_call.1']
    %16 = vsyncpa [#allocation3], 0
    %s17 = scalar_lea.sflag [#allocation3], 1
    %18 = vsyncpa %s17, 0
    %19 = vsyncpa [#allocation6], 0
    %s20 = scalar_lea.sflag [#allocation6], 1
    %21 = vsyncpa %s20, 0
    %22 = vsyncpa [#allocation9], 0
    %23 = vsyncpa [#allocation4], 0
    %s24 = scalar_lea.sflag [#allocation4], 1
    %25 = vsyncpa %s24, 0
    %26 = vsyncpa [#allocation13], 0
    %s27 = scalar_lea.sflag [#allocation13], 1
    %28 = vsyncpa %s27, 0
    loop: start=0, step=1, limit=4
    $region2: #{tpu_custom_call.1} parent=1 // loop_pre_header
      _
    $region3: #{tpu_custom_call.1} parent=1 // loop_header
      %s30 = sphi 0, %s34
      %p31 = scmp.ge.s32.totalorder %s30, 4
      %s37 = sphi 0, %s56
      %s38 = sphi 0, %s52
      %s39 = sphi 0, %s48
      %s40 = sphi 0, %s37
      %s41 = sphi 0, %s38
      %s42 = sphi 0, %s39
      %s43 = sphi 0, %s40
      %s44 = sphi 0, %s41
      %s45 = sphi 0, %s42
      %s63 = sphi 0, %s65
      %s66 = sphi 0, %s63
      %s67 = sphi 0, %s66
      %s83 = sphi 0, %s67
      %s93 = sphi 0, %s95
      %s96 = sphi 0, %s93
      %s97 = sphi 0, %s96
      %s113 = sphi 0, %s97
      %s121 = sphi 0, %s123
      %s124 = sphi 0, %s121
      %s125 = sphi 0, %s124
      %s141 = sphi 0, %s125
      %s149 = sphi 0, %s151
      %s152 = sphi 0, %s149
      %s153 = sphi 0, %s152
      %s169 = sphi 0, %s153
      %s177 = sphi 0, %s179
      %s180 = sphi 0, %s177
      %s181 = sphi 0, %s180
      %s197 = sphi 0, %s181
      %s201 = sphi 0, %s201
      %s203 = sphi 0, %s201
      %s204 = sphi 0, %s203
      %s218 = sphi 0, %s204
      %s222 = sphi 0, %s222
      %s224 = sphi 0, %s222
      %s225 = sphi 0, %s224
      %s239 = sphi 0, %s225
      %s243 = sphi 0, %s243
      %s245 = sphi 0, %s243
      %s246 = sphi 0, %s245
      %s260 = sphi 0, %s246
      %s264 = sphi 0, %s264
      %s266 = sphi 0, %s264
      %s267 = sphi 0, %s266
      %s281 = sphi 0, %s267
      %s291 = sphi 0, %s293
      %s294 = sphi 0, %s291
      %s295 = sphi 0, %s294
      %s311 = sphi 0, %s295
      %s319 = sphi 0, %s321
      %s322 = sphi 0, %s319
      %s323 = sphi 0, %s322
      %s339 = sphi 0, %s323
    $region4: #{tpu_custom_call.1} parent=1 // loop_header_branch
      %33 = sbr.rel (%p31) target = $region8
    $region5: #{tpu_custom_call.1} parent=1 // loop_body
      %s35 = ssub.s32 %s30, 1
      %s36 = ssub.s32 %s30, 2
      %s46 = sadd.s32 1, %s39
      %p47 = scmp.ge.s32.totalorder %s46, 1
      %s48 = scalar_select %p47, 0, %s46
      %s49 = sadd.s32 1, %s38
      %s50 = scalar_select %p47, %s49, %s38
      %p51 = scmp.ge.s32.totalorder %s50, 1
      %s52 = scalar_select %p51, 0, %s50
      %s53 = sadd.s32 1, %s37
      %s54 = scalar_select %p51, %s53, %s37
      %p55 = scmp.ge.s32.totalorder %s54, 2
      %s56 = scalar_select %p55, 0, %s54
      %s57 = ssub.s32 %s37, %s56
      %s58 = ssub.s32 %s38, %s52
      %s59 = sor.u32 %s57, %s58
      %s60 = ssub.s32 %s39, %s48
      %s61 = sor.u32 %s59, %s60
      %p62 = scmp.eq.s32.totalorder %s61, 0
      %s64 = sadd.s32 %s63, 1
      %s65 = scalar_select %p62, %s63, %s64
      %p68 = pneg %p62
      %p69 = scmp.eq.s32.totalorder %s30, 1
      %p70 = por %p68, %p69
      %p71 = scmp.ne.s32.totalorder %s63, %s66
      %p72 = scmp.eq.s32.totalorder %s30, 0
      %p73 = por %p71, %p72
      %p74 = scmp.ne.s32.totalorder %s63, %s66
      %p75 = scmp.eq.s32.totalorder %s35, 1
      %p76 = por %p74, %p75
      %p77 = scmp.ne.s32.totalorder %s66, %s67
      %p78 = scmp.eq.s32.totalorder %s35, 0
      %p79 = por %p77, %p78
      %p80 = scmp.ne.s32.totalorder %s66, %s67
      %p81 = scmp.eq.s32.totalorder %s36, 1
      %p82 = por %p80, %p81
      %p84 = scmp.ne.s32.totalorder %s67, %s83
      %p85 = scmp.eq.s32.totalorder %s36, 0
      %p86 = por %p84, %p85
      %s87 = ssub.s32 %s37, %s56
      %s88 = ssub.s32 %s38, %s52
      %s89 = sor.u32 %s87, %s88
      %s90 = ssub.s32 %s39, %s48
      %s91 = sor.u32 %s89, %s90
      %p92 = scmp.eq.s32.totalorder %s91, 0
      %s94 = sadd.s32 %s93, 1
      %s95 = scalar_select %p92, %s93, %s94
      %p98 = pneg %p92
      %p99 = scmp.eq.s32.totalorder %s30, 1
      %p100 = por %p98, %p99
      %p101 = scmp.ne.s32.totalorder %s93, %s96
      %p102 = scmp.eq.s32.totalorder %s30, 0
      %p103 = por %p101, %p102
      %p104 = scmp.ne.s32.totalorder %s93, %s96
      %p105 = scmp.eq.s32.totalorder %s35, 1
      %p106 = por %p104, %p105
      %p107 = scmp.ne.s32.totalorder %s96, %s97
      %p108 = scmp.eq.s32.totalorder %s35, 0
      %p109 = por %p107, %p108
      %p110 = scmp.ne.s32.totalorder %s96, %s97
      %p111 = scmp.eq.s32.totalorder %s36, 1
      %p112 = por %p110, %p111
      %p114 = scmp.ne.s32.totalorder %s97, %s113
      %p115 = scmp.eq.s32.totalorder %s36, 0
      %p116 = por %p114, %p115
      %s117 = ssub.s32 %s37, %s56
      %s118 = ssub.s32 %s39, %s48
      %s119 = sor.u32 %s117, %s118
      %p120 = scmp.eq.s32.totalorder %s119, 0
      %s122 = sadd.s32 %s121, 1
      %s123 = scalar_select %p120, %s121, %s122
      %p126 = pneg %p120
      %p127 = scmp.eq.s32.totalorder %s30, 1
      %p128 = por %p126, %p127
      %p129 = scmp.ne.s32.totalorder %s121, %s124
      %p130 = scmp.eq.s32.totalorder %s30, 0
      %p131 = por %p129, %p130
      %p132 = scmp.ne.s32.totalorder %s121, %s124
      %p133 = scmp.eq.s32.totalorder %s35, 1
      %p134 = por %p132, %p133
      %p135 = scmp.ne.s32.totalorder %s124, %s125
      %p136 = scmp.eq.s32.totalorder %s35, 0
      %p137 = por %p135, %p136
      %p138 = scmp.ne.s32.totalorder %s124, %s125
      %p139 = scmp.eq.s32.totalorder %s36, 1
      %p140 = por %p138, %p139
      %p142 = scmp.ne.s32.totalorder %s125, %s141
      %p143 = scmp.eq.s32.totalorder %s36, 0
      %p144 = por %p142, %p143
      %s145 = ssub.s32 %s37, %s56
      %s146 = ssub.s32 %s39, %s48
      %s147 = sor.u32 %s145, %s146
      %p148 = scmp.eq.s32.totalorder %s147, 0
      %s150 = sadd.s32 %s149, 1
      %s151 = scalar_select %p148, %s149, %s150
      %p154 = pneg %p148
      %p155 = scmp.eq.s32.totalorder %s30, 1
      %p156 = por %p154, %p155
      %p157 = scmp.ne.s32.totalorder %s149, %s152
      %p158 = scmp.eq.s32.totalorder %s30, 0
      %p159 = por %p157, %p158
      %p160 = scmp.ne.s32.totalorder %s149, %s152
      %p161 = scmp.eq.s32.totalorder %s35, 1
      %p162 = por %p160, %p161
      %p163 = scmp.ne.s32.totalorder %s152, %s153
      %p164 = scmp.eq.s32.totalorder %s35, 0
      %p165 = por %p163, %p164
      %p166 = scmp.ne.s32.totalorder %s152, %s153
      %p167 = scmp.eq.s32.totalorder %s36, 1
      %p168 = por %p166, %p167
      %p170 = scmp.ne.s32.totalorder %s153, %s169
      %p171 = scmp.eq.s32.totalorder %s36, 0
      %p172 = por %p170, %p171
      %s173 = ssub.s32 %s37, %s56
      %s174 = ssub.s32 %s38, %s52
      %s175 = sor.u32 %s173, %s174
      %p176 = scmp.eq.s32.totalorder %s175, 0
      %s178 = sadd.s32 %s177, 1
      %s179 = scalar_select %p176, %s177, %s178
      %p182 = pneg %p176
      %p183 = scmp.eq.s32.totalorder %s30, 1
      %p184 = por %p182, %p183
      %p185 = scmp.ne.s32.totalorder %s177, %s180
      %p186 = scmp.eq.s32.totalorder %s30, 0
      %p187 = por %p185, %p186
      %p188 = scmp.ne.s32.totalorder %s177, %s180
      %p189 = scmp.eq.s32.totalorder %s35, 1
      %p190 = por %p188, %p189
      %p191 = scmp.ne.s32.totalorder %s180, %s181
      %p192 = scmp.eq.s32.totalorder %s35, 0
      %p193 = por %p191, %p192
      %p194 = scmp.ne.s32.totalorder %s180, %s181
      %p195 = scmp.eq.s32.totalorder %s36, 1
      %p196 = por %p194, %p195
      %p198 = scmp.ne.s32.totalorder %s181, %s197
      %p199 = scmp.eq.s32.totalorder %s36, 0
      %p200 = por %p198, %p199
      %s202 = sadd.s32 %s201, 1
      %p205 = scmp.eq.s32.totalorder %s30, 1
      %p206 = scmp.ne.s32.totalorder %s201, %s203
      %p207 = scmp.eq.s32.totalorder %s30, 0
      %p208 = por %p206, %p207
      %p209 = scmp.ne.s32.totalorder %s201, %s203
      %p210 = scmp.eq.s32.totalorder %s35, 1
      %p211 = por %p209, %p210
      %p212 = scmp.ne.s32.totalorder %s203, %s204
      %p213 = scmp.eq.s32.totalorder %s35, 0
      %p214 = por %p212, %p213
      %p215 = scmp.ne.s32.totalorder %s203, %s204
      %p216 = scmp.eq.s32.totalorder %s36, 1
      %p217 = por %p215, %p216
      %p219 = scmp.ne.s32.totalorder %s204, %s218
      %p220 = scmp.eq.s32.totalorder %s36, 0
      %p221 = por %p219, %p220
      %s223 = sadd.s32 %s222, 1
      %p226 = scmp.eq.s32.totalorder %s30, 1
      %p227 = scmp.ne.s32.totalorder %s222, %s224
      %p228 = scmp.eq.s32.totalorder %s30, 0
      %p229 = por %p227, %p228
      %p230 = scmp.ne.s32.totalorder %s222, %s224
      %p231 = scmp.eq.s32.totalorder %s35, 1
      %p232 = por %p230, %p231
      %p233 = scmp.ne.s32.totalorder %s224, %s225
      %p234 = scmp.eq.s32.totalorder %s35, 0
      %p235 = por %p233, %p234
      %p236 = scmp.ne.s32.totalorder %s224, %s225
      %p237 = scmp.eq.s32.totalorder %s36, 1
      %p238 = por %p236, %p237
      %p240 = scmp.ne.s32.totalorder %s225, %s239
      %p241 = scmp.eq.s32.totalorder %s36, 0
      %p242 = por %p240, %p241
      %s244 = sadd.s32 %s243, 1
      %p247 = scmp.eq.s32.totalorder %s30, 1
      %p248 = scmp.ne.s32.totalorder %s243, %s245
      %p249 = scmp.eq.s32.totalorder %s30, 0
      %p250 = por %p248, %p249
      %p251 = scmp.ne.s32.totalorder %s243, %s245
      %p252 = scmp.eq.s32.totalorder %s35, 1
      %p253 = por %p251, %p252
      %p254 = scmp.ne.s32.totalorder %s245, %s246
      %p255 = scmp.eq.s32.totalorder %s35, 0
      %p256 = por %p254, %p255
      %p257 = scmp.ne.s32.totalorder %s245, %s246
      %p258 = scmp.eq.s32.totalorder %s36, 1
      %p259 = por %p257, %p258
      %p261 = scmp.ne.s32.totalorder %s246, %s260
      %p262 = scmp.eq.s32.totalorder %s36, 0
      %p263 = por %p261, %p262
      %s265 = sadd.s32 %s264, 1
      %p268 = scmp.eq.s32.totalorder %s30, 1
      %p269 = scmp.ne.s32.totalorder %s264, %s266
      %p270 = scmp.eq.s32.totalorder %s30, 0
      %p271 = por %p269, %p270
      %p272 = scmp.ne.s32.totalorder %s264, %s266
      %p273 = scmp.eq.s32.totalorder %s35, 1
      %p274 = por %p272, %p273
      %p275 = scmp.ne.s32.totalorder %s266, %s267
      %p276 = scmp.eq.s32.totalorder %s35, 0
      %p277 = por %p275, %p276
      %p278 = scmp.ne.s32.totalorder %s266, %s267
      %p279 = scmp.eq.s32.totalorder %s36, 1
      %p280 = por %p278, %p279
      %p282 = scmp.ne.s32.totalorder %s267, %s281
      %p283 = scmp.eq.s32.totalorder %s36, 0
      %p284 = por %p282, %p283
      %s285 = ssub.s32 %s37, %s56
      %s286 = ssub.s32 %s38, %s52
      %s287 = sor.u32 %s285, %s286
      %s288 = ssub.s32 %s39, %s48
      %s289 = sor.u32 %s287, %s288
      %p290 = scmp.eq.s32.totalorder %s289, 0
      %s292 = sadd.s32 %s291, 1
      %s293 = scalar_select %p290, %s291, %s292
      %p296 = pneg %p290
      %p297 = scmp.eq.s32.totalorder %s30, 1
      %p298 = por %p296, %p297
      %p299 = scmp.ne.s32.totalorder %s291, %s294
      %p300 = scmp.eq.s32.totalorder %s30, 0
      %p301 = por %p299, %p300
      %p302 = scmp.ne.s32.totalorder %s291, %s294
      %p303 = scmp.eq.s32.totalorder %s35, 1
      %p304 = por %p302, %p303
      %p305 = scmp.ne.s32.totalorder %s294, %s295
      %p306 = scmp.eq.s32.totalorder %s35, 0
      %p307 = por %p305, %p306
      %p308 = scmp.ne.s32.totalorder %s294, %s295
      %p309 = scmp.eq.s32.totalorder %s36, 1
      %p310 = por %p308, %p309
      %p312 = scmp.ne.s32.totalorder %s295, %s311
      %p313 = scmp.eq.s32.totalorder %s36, 0
      %p314 = por %p312, %p313
      %s315 = ssub.s32 %s37, %s56
      %s316 = ssub.s32 %s38, %s52
      %s317 = sor.u32 %s315, %s316
      %p318 = scmp.eq.s32.totalorder %s317, 0
      %s320 = sadd.s32 %s319, 1
      %s321 = scalar_select %p318, %s319, %s320
      %p324 = pneg %p318
      %p325 = scmp.eq.s32.totalorder %s30, 1
      %p326 = por %p324, %p325
      %p327 = scmp.ne.s32.totalorder %s319, %s322
      %p328 = scmp.eq.s32.totalorder %s30, 0
      %p329 = por %p327, %p328
      %p330 = scmp.ne.s32.totalorder %s319, %s322
      %p331 = scmp.eq.s32.totalorder %s35, 1
      %p332 = por %p330, %p331
      %p333 = scmp.ne.s32.totalorder %s322, %s323
      %p334 = scmp.eq.s32.totalorder %s35, 0
      %p335 = por %p333, %p334
      %p336 = scmp.ne.s32.totalorder %s322, %s323
      %p337 = scmp.eq.s32.totalorder %s36, 1
      %p338 = por %p336, %p337
      %p340 = scmp.ne.s32.totalorder %s323, %s339
      %p341 = scmp.eq.s32.totalorder %s36, 0
      %p342 = por %p340, %p341
      %p343 = scmp.le.s32.totalorder 1, %s30
      %p344 = scmp.lt.s32.totalorder %s30, 3
      %p345 = pnand %p343, %p344
      %p346 = pneg %p345
      // Predicated region
      $region9: #{tpu_custom_call.1} parent=5 // pred_check
        _
      $region10: #{tpu_custom_call.1} parent=5 // pred_check_branch
        %348 = sbr.rel (%p345) target = $region12
      $region11: #{tpu_custom_call.1} parent=5 // pred_region
        %s349 = ssub.s32 %s30, 1
        // Predicated region
        $region13: #{tpu_custom_call.1} parent=11 // pred_check
          %p350 = pneg %p214
        $region14: #{tpu_custom_call.1} parent=11 // pred_check_branch
          %352 = sbr.rel (%p350) target = $region16
        $region15: #{tpu_custom_call.1} parent=11 // pred_region
          %s354 = ssub.s32 1024, 1024
          %355 = vsyncadd [#allocation9], %s354
          %s356 = sshll.u32 [#allocation8], 4
          %s357 = int_to_ptr.vmem [resolvable:$true] %s356
          %362 = dma.hbm_to_vmem [thread:$0]  %s5, 1024, %s357, [#allocation9], 64, 64, 4
        $region16: #{tpu_custom_call.1} parent=11 // pred_fallthru
          _
        // Predicated region
        $region17: #{tpu_custom_call.1} parent=11 // pred_check
          %p363 = pneg %p235
        $region18: #{tpu_custom_call.1} parent=11 // pred_check_branch
          %365 = sbr.rel (%p363) target = $region20
        $region19: #{tpu_custom_call.1} parent=11 // pred_region
          _
        $region20: #{tpu_custom_call.1} parent=11 // pred_fallthru
          _
        // Predicated region
        $region21: #{tpu_custom_call.1} parent=11 // pred_check
          %p366 = pneg %p256
        $region22: #{tpu_custom_call.1} parent=11 // pred_check_branch
          %368 = sbr.rel (%p366) target = $region24
        $region23: #{tpu_custom_call.1} parent=11 // pred_region
          %s370 = ssub.s32 1024, 1024
          %371 = vsyncadd [#allocation9], %s370
          %s372 = sshll.u32 [#allocation10], 4
          %s373 = int_to_ptr.vmem [resolvable:$true] %s372
          %378 = dma.hbm_to_vmem [thread:$0]  %s7, 1024, %s373, [#allocation9], 64, 64, 4
        $region24: #{tpu_custom_call.1} parent=11 // pred_fallthru
          _
        // Predicated region
        $region25: #{tpu_custom_call.1} parent=11 // pred_check
          %p379 = pneg %p277
        $region26: #{tpu_custom_call.1} parent=11 // pred_check_branch
          %381 = sbr.rel (%p379) target = $region28
        $region27: #{tpu_custom_call.1} parent=11 // pred_region
          _
        $region28: #{tpu_custom_call.1} parent=11 // pred_fallthru
          _
      $region12: #{tpu_custom_call.1} parent=5 // pred_fallthru
        _
      %p382 = scmp.lt.s32.totalorder %s30, 2
      // Predicated region
      $region29: #{tpu_custom_call.1} parent=5 // pred_check
        %p383 = pneg %p382
      $region30: #{tpu_custom_call.1} parent=5 // pred_check_branch
        %385 = sbr.rel (%p383) target = $region32
      $region31: #{tpu_custom_call.1} parent=5 // pred_region
        // Predicated region
        $region33: #{tpu_custom_call.1} parent=31 // pred_check
          %p386 = pneg %p73
        $region34: #{tpu_custom_call.1} parent=31 // pred_check_branch
          %388 = sbr.rel (%p386) target = $region36
        $region35: #{tpu_custom_call.1} parent=31 // pred_region
          %s389 = smul.u32 2, %s38
          %p390 = scmp.lt.s32.totalorder %s37, 1
          %s391 = scalar_select %p390, %s37, 1
          %p392 = scmp.lt.s32.totalorder %s389, 1
          %s393 = scalar_select %p392, %s389, 1
          %p394 = scmp.lt.s32.totalorder %s39, 0
          %s395 = scalar_select %p394, %s39, 0
          %s396 = sadd.s32 %s395, %s393
          %s397 = smul.addr %s391, 2
          %s398 = sadd.s32 %s396, %s397
          %s399 = smul.addr %s398, 8
          %s400 = scalar_lea.vmem %s0, %s399
          %s401 = smul.u32 2, %s38
        $region36: #{tpu_custom_call.1} parent=31 // pred_fallthru
          _
        // Predicated region
        $region37: #{tpu_custom_call.1} parent=31 // pred_check
          %p402 = pneg %p103
        $region38: #{tpu_custom_call.1} parent=31 // pred_check_branch
          %404 = sbr.rel (%p402) target = $region40
        $region39: #{tpu_custom_call.1} parent=31 // pred_region
          %s405 = sand.u32 %s93, 1
          %s406 = scalar_lea.sflag [#allocation3], %s405
          %s407 = sand.u32 %s93, 1
          %s408 = smul.addr %s407, 128
          %s409 = scalar_lea.vmem [#allocation2], %s408
          %s410 = smul.u32 16, %s38
          %s411 = smul.u32 2, %s39
          %s413 = ssub.s32 2048, 2048
          %414 = vsyncadd %s406, %s413
          %s415 = smul.addr %s410, 2
          %s416 = sadd.s32 %s411, %s415
          %s417 = smul.addr %s37, 32
          %s418 = sadd.s32 %s416, %s417
          %s419 = smul.addr %s418, 64
          %s420 = scalar_lea.hbm %s1, %s419
          %s421 = sshll.u32 %s409, 4
          %s422 = int_to_ptr.vmem [resolvable:$true] %s421
          %427 = dma.hbm_to_vmem [thread:$0]  %s420, 2048, %s422, %s406, 64, 64, 4
        $region40: #{tpu_custom_call.1} parent=31 // pred_fallthru
          _
        // Predicated region
        $region41: #{tpu_custom_call.1} parent=31 // pred_check
          %p428 = pneg %p131
        $region42: #{tpu_custom_call.1} parent=31 // pred_check_branch
          %430 = sbr.rel (%p428) target = $region44
        $region43: #{tpu_custom_call.1} parent=31 // pred_region
          %s431 = sand.u32 %s30, 1
          %s432 = scalar_lea.sflag [#allocation6], %s431
          %s433 = sand.u32 %s121, 1
          %s434 = smul.addr %s433, 16
          %s435 = scalar_lea.vmem [#allocation5], %s434
          %s436 = smul.u32 2, %s39
          %s438 = ssub.s32 256, 256
          %439 = vsyncadd %s432, %s438
          %s440 = smul.addr %s37, 2
          %s441 = sadd.s32 %s436, %s440
          %s442 = smul.addr %s441, 128
          %s443 = scalar_lea.hbm %s2, %s442
          %s444 = sshll.u32 %s435, 4
          %s445 = int_to_ptr.vmem [resolvable:$true] %s444
          %450 = dma.hbm_to_vmem [thread:$0]  %s443, 256, %s445, %s432, 128, 128, 8
        $region44: #{tpu_custom_call.1} parent=31 // pred_fallthru
          _
        // Predicated region
        $region45: #{tpu_custom_call.1} parent=31 // pred_check
          %p451 = pneg %p159
        $region46: #{tpu_custom_call.1} parent=31 // pred_check_branch
          %453 = sbr.rel (%p451) target = $region48
        $region47: #{tpu_custom_call.1} parent=31 // pred_region
          %s454 = sand.u32 %s30, 1
          %s455 = scalar_lea.sflag [#allocation6], %s454
          %s456 = sand.u32 %s149, 1
          %s457 = smul.addr %s456, 16
          %s458 = scalar_lea.vmem [#allocation7], %s457
          %s459 = smul.u32 2, %s39
          %s461 = ssub.s32 256, 256
          %462 = vsyncadd %s455, %s461
          %s463 = smul.addr %s37, 2
          %s464 = sadd.s32 %s459, %s463
          %s465 = smul.addr %s464, 128
          %s466 = scalar_lea.hbm %s3, %s465
          %s467 = sshll.u32 %s458, 4
          %s468 = int_to_ptr.vmem [resolvable:$true] %s467
          %473 = dma.hbm_to_vmem [thread:$0]  %s466, 256, %s468, %s455, 128, 128, 8
        $region48: #{tpu_custom_call.1} parent=31 // pred_fallthru
          _
        // Predicated region
        $region49: #{tpu_custom_call.1} parent=31 // pred_check
          %p474 = pneg %p187
        $region50: #{tpu_custom_call.1} parent=31 // pred_check_branch
          %476 = sbr.rel (%p474) target = $region52
        $region51: #{tpu_custom_call.1} parent=31 // pred_region
          %s477 = smul.u32 2, %s38
          %p478 = scmp.lt.s32.totalorder %s37, 1
          %s479 = scalar_select %p478, %s37, 1
          %p480 = scmp.lt.s32.totalorder %s477, 1
          %s481 = scalar_select %p480, %s477, 1
          %s482 = smul.addr %s479, 2
          %s483 = sadd.s32 %s481, %s482
          %s484 = smul.addr %s483, 8
          %s485 = scalar_lea.vmem %s4, %s484
          %s486 = smul.u32 2, %s38
        $region52: #{tpu_custom_call.1} parent=31 // pred_fallthru
          _
      $region32: #{tpu_custom_call.1} parent=5 // pred_fallthru
        _
      %p487 = scmp.le.s32.totalorder 1, %s30
      %p488 = scmp.lt.s32.totalorder %s30, 3
      %p489 = pnand %p487, %p488
      %p490 = pneg %p489
      // Predicated region
      $region53: #{tpu_custom_call.1} parent=5 // pred_check
        _
      $region54: #{tpu_custom_call.1} parent=5 // pred_check_branch
        %492 = sbr.rel (%p489) target = $region56
      $region55: #{tpu_custom_call.1} parent=5 // pred_region
        %s493 = ssub.s32 %s30, 1
        %s494 = sand.u32 %s96, 1
        %s495 = scalar_lea.sflag [#allocation3], %s494
        %s496 = sand.u32 %s96, 1
        %s497 = smul.addr %s496, 128
        %s498 = scalar_lea.vmem [#allocation2], %s497
        // Predicated region
        $region57: #{tpu_custom_call.1} parent=55 // pred_check
          %p499 = pneg %p109
        $region58: #{tpu_custom_call.1} parent=55 // pred_check_branch
          %501 = sbr.rel (%p499) target = $region60
        $region59: #{tpu_custom_call.1} parent=55 // pred_region
          %502 = dma.done %s495, 2048
        $region60: #{tpu_custom_call.1} parent=55 // pred_fallthru
          _
        %s503 = sand.u32 %s35, 1
        %s504 = scalar_lea.sflag [#allocation6], %s503
        %s505 = sand.u32 %s124, 1
        %s506 = smul.addr %s505, 16
        %s507 = scalar_lea.vmem [#allocation5], %s506
        // Predicated region
        $region61: #{tpu_custom_call.1} parent=55 // pred_check
          %p508 = pneg %p137
        $region62: #{tpu_custom_call.1} parent=55 // pred_check_branch
          %510 = sbr.rel (%p508) target = $region64
        $region63: #{tpu_custom_call.1} parent=55 // pred_region
          %511 = dma.done %s504, 256
        $region64: #{tpu_custom_call.1} parent=55 // pred_fallthru
          _
        %s512 = sand.u32 %s35, 1
        %s513 = scalar_lea.sflag [#allocation6], %s512
        %s514 = sand.u32 %s152, 1
        %s515 = smul.addr %s514, 16
        %s516 = scalar_lea.vmem [#allocation7], %s515
        // Predicated region
        $region65: #{tpu_custom_call.1} parent=55 // pred_check
          %p517 = pneg %p165
        $region66: #{tpu_custom_call.1} parent=55 // pred_check_branch
          %519 = sbr.rel (%p517) target = $region68
        $region67: #{tpu_custom_call.1} parent=55 // pred_region
          %520 = dma.done %s513, 256
        $region68: #{tpu_custom_call.1} parent=55 // pred_fallthru
          _
        // Predicated region
        $region69: #{tpu_custom_call.1} parent=55 // pred_check
          %p521 = pneg %p214
        $region70: #{tpu_custom_call.1} parent=55 // pred_check_branch
          %523 = sbr.rel (%p521) target = $region72
        $region71: #{tpu_custom_call.1} parent=55 // pred_region
          %524 = dma.done [#allocation9], 1024
        $region72: #{tpu_custom_call.1} parent=55 // pred_fallthru
          _
        // Predicated region
        $region73: #{tpu_custom_call.1} parent=55 // pred_check
          %p525 = pneg %p256
        $region74: #{tpu_custom_call.1} parent=55 // pred_check_branch
          %527 = sbr.rel (%p525) target = $region76
        $region75: #{tpu_custom_call.1} parent=55 // pred_region
          %528 = dma.done [#allocation9], 1024
        $region76: #{tpu_custom_call.1} parent=55 // pred_fallthru
          _
        %s529 = smul.u32 2, %s41
        %p530 = scmp.lt.s32.totalorder %s40, 1
        %s531 = scalar_select %p530, %s40, 1
        %p532 = scmp.lt.s32.totalorder %s529, 1
        %s533 = scalar_select %p532, %s529, 1
        %p534 = scmp.lt.s32.totalorder %s42, 0
        %s535 = scalar_select %p534, %s42, 0
        %s536 = sadd.s32 %s535, %s533
        %s537 = smul.addr %s531, 2
        %s538 = sadd.s32 %s536, %s537
        %s539 = smul.addr %s538, 8
        %s540 = scalar_lea.vmem %s0, %s539
        %p541 = pneg %p79
        %p542 = pneg %p76
        %s543 = sand.u32 %s96, 1
        %s544 = scalar_lea.sflag [#allocation3], %s543
        %s545 = sand.u32 %s96, 1
        %s546 = smul.addr %s545, 128
        %s547 = scalar_lea.vmem [#allocation2], %s546
        %p548 = pneg %p109
        %p549 = pneg %p106
        %s550 = sand.u32 %s35, 1
        %s551 = scalar_lea.sflag [#allocation6], %s550
        %s552 = sand.u32 %s124, 1
        %s553 = smul.addr %s552, 16
        %s554 = scalar_lea.vmem [#allocation5], %s553
        %p555 = pneg %p137
        %p556 = pneg %p134
        %s557 = sand.u32 %s35, 1
        %s558 = scalar_lea.sflag [#allocation6], %s557
        %s559 = sand.u32 %s152, 1
        %s560 = smul.addr %s559, 16
        %s561 = scalar_lea.vmem [#allocation7], %s560
        %p562 = pneg %p165
        %p563 = pneg %p162
        %s564 = smul.u32 2, %s41
        %p565 = scmp.lt.s32.totalorder %s40, 1
        %s566 = scalar_select %p565, %s40, 1
        %p567 = scmp.lt.s32.totalorder %s564, 1
        %s568 = scalar_select %p567, %s564, 1
        %s569 = smul.addr %s566, 2
        %s570 = sadd.s32 %s568, %s569
        %s571 = smul.addr %s570, 8
        %s572 = scalar_lea.vmem %s4, %s571
        %p573 = pneg %p193
        %p574 = pneg %p190
        %p575 = pneg %p214
        %p576 = pneg %p211
        %p577 = pneg %p235
        %p578 = pneg %p232
        %p579 = pneg %p256
        %p580 = pneg %p253
        %p581 = pneg %p277
        %p582 = pneg %p274
        %p583 = pneg %p307
        %p584 = pneg %p304
        %s585 = sand.u32 %s294, 1
        %s586 = scalar_lea.sflag [#allocation4], %s585
        %s587 = sand.u32 %s294, 1
        %s588 = smul.addr %s587, 128
        %s589 = scalar_lea.vmem [#allocation11], %s588
        %p590 = pneg %p335
        %p591 = pneg %p332
        %s592 = sand.u32 %s322, 1
        %s593 = scalar_lea.sflag [#allocation13], %s592
        %s594 = sand.u32 %s322, 1
        %s595 = smul.addr %s594, 16
        %s596 = scalar_lea.vmem [#allocation12], %s595
        %s597 = smul.u32 2, %s41
        %p598 = scmp.lt.s32.totalorder %s40, 1
        %s599 = scalar_select %p598, %s40, 1
        %p600 = scmp.lt.s32.totalorder %s597, 1
        %s601 = scalar_select %p600, %s597, 1
        %p602 = scmp.lt.s32.totalorder %s42, 0
        %s603 = scalar_select %p602, %s42, 0
        %s604 = sadd.s32 %s603, %s601
        %s605 = smul.addr %s599, 2
        %s606 = sadd.s32 %s604, %s605
        %s607 = smul.addr %s606, 8
        %s608 = scalar_lea.vmem %s0, %s607
        %s609 = smul.u32 2, %s41
        %s610 = smul.u32 16, %s41
        %s611 = smul.u32 2, %s42
        %s612 = smul.u32 2, %s42
        %s613 = smul.u32 2, %s42
        %s614 = smul.u32 2, %s41
        %p615 = scmp.lt.s32.totalorder %s40, 1
        %s616 = scalar_select %p615, %s40, 1
        %p617 = scmp.lt.s32.totalorder %s614, 1
        %s618 = scalar_select %p617, %s614, 1
        %s619 = smul.addr %s616, 2
        %s620 = sadd.s32 %s618, %s619
        %s621 = smul.addr %s620, 8
        %s622 = scalar_lea.vmem %s4, %s621
        %s623 = smul.u32 2, %s41
        %s624 = smul.u32 16, %s41
        %s625 = smul.u32 2, %s42
        %s626 = smul.u32 2, %s41
        %v628 = vld [vmem:[%s608] sm:$0xff]
        %v629 = vld [vmem:[%s608 + $0x8] sm:$0xff]
        %v630 = vld [vmem:[%s498] sm:$0xf]
        %v631 = vld [vmem:[%s498 + $0x4] sm:$0xf]
        %v632 = vld [vmem:[%s498 + $0x8] sm:$0xf]
        %v633 = vld [vmem:[%s498 + $0xc] sm:$0xf]
        %v634 = vld [vmem:[%s498 + $0x10] sm:$0xf]
        %v635 = vld [vmem:[%s498 + $0x14] sm:$0xf]
        %v636 = vld [vmem:[%s498 + $0x18] sm:$0xf]
        %v637 = vld [vmem:[%s498 + $0x1c] sm:$0xf]
        %v638 = vld [vmem:[%s498 + $0x20] sm:$0xf]
        %v639 = vld [vmem:[%s498 + $0x24] sm:$0xf]
        %v640 = vld [vmem:[%s498 + $0x28] sm:$0xf]
        %v641 = vld [vmem:[%s498 + $0x2c] sm:$0xf]
        %v642 = vld [vmem:[%s498 + $0x30] sm:$0xf]
        %v643 = vld [vmem:[%s498 + $0x34] sm:$0xf]
        %v644 = vld [vmem:[%s498 + $0x38] sm:$0xf]
        %v645 = vld [vmem:[%s498 + $0x3c] sm:$0xf]
        %v646 = vld [vmem:[%s498 + $0x40] sm:$0xf]
        %v647 = vld [vmem:[%s498 + $0x44] sm:$0xf]
        %v648 = vld [vmem:[%s498 + $0x48] sm:$0xf]
        %v649 = vld [vmem:[%s498 + $0x4c] sm:$0xf]
        %v650 = vld [vmem:[%s498 + $0x50] sm:$0xf]
        %v651 = vld [vmem:[%s498 + $0x54] sm:$0xf]
        %v652 = vld [vmem:[%s498 + $0x58] sm:$0xf]
        %v653 = vld [vmem:[%s498 + $0x5c] sm:$0xf]
        %v654 = vld [vmem:[%s498 + $0x60] sm:$0xf]
        %v655 = vld [vmem:[%s498 + $0x64] sm:$0xf]
        %v656 = vld [vmem:[%s498 + $0x68] sm:$0xf]
        %v657 = vld [vmem:[%s498 + $0x6c] sm:$0xf]
        %v658 = vld [vmem:[%s498 + $0x70] sm:$0xf]
        %v659 = vld [vmem:[%s498 + $0x74] sm:$0xf]
        %v660 = vld [vmem:[%s498 + $0x78] sm:$0xf]
        %v661 = vld [vmem:[%s498 + $0x7c] sm:$0xf]
        %v662 = vld [vmem:[%s507] sm:$0xff]
        %v663 = vld [vmem:[%s507 + $0x8] sm:$0xff]
        %v664 = vld [vmem:[%s516] sm:$0xff]
        %v665 = vld [vmem:[%s516 + $0x8] sm:$0xff]
        %v666 = vld [vmem:[#allocation8] sm:$0xf]
        %v667 = vld [vmem:[#allocation8 + $0x4] sm:$0xf]
        %v668 = vld [vmem:[#allocation8 + $0x8] sm:$0xf]
        %v669 = vld [vmem:[#allocation8 + $0xc] sm:$0xf]
        %v670 = vld [vmem:[#allocation8 + $0x10] sm:$0xf]
        %v671 = vld [vmem:[#allocation8 + $0x14] sm:$0xf]
        %v672 = vld [vmem:[#allocation8 + $0x18] sm:$0xf]
        %v673 = vld [vmem:[#allocation8 + $0x1c] sm:$0xf]
        %v674 = vld [vmem:[#allocation8 + $0x20] sm:$0xf]
        %v675 = vld [vmem:[#allocation8 + $0x24] sm:$0xf]
        %v676 = vld [vmem:[#allocation8 + $0x28] sm:$0xf]
        %v677 = vld [vmem:[#allocation8 + $0x2c] sm:$0xf]
        %v678 = vld [vmem:[#allocation8 + $0x30] sm:$0xf]
        %v679 = vld [vmem:[#allocation8 + $0x34] sm:$0xf]
        %v680 = vld [vmem:[#allocation8 + $0x38] sm:$0xf]
        %v681 = vld [vmem:[#allocation8 + $0x3c] sm:$0xf]
        %v714 = vunpack.c.l.b16 %v630
        %v715 = vunpack.c.l.b16 %v631
        %v716 = vunpack.c.l.b16 %v632
        %v717 = vunpack.c.l.b16 %v633
        %v718 = vunpack.c.l.b16 %v634
        %v719 = vunpack.c.l.b16 %v635
        %v720 = vunpack.c.l.b16 %v636
        %v721 = vunpack.c.l.b16 %v637
        %v722 = vunpack.c.l.b16 %v638
        %v723 = vunpack.c.l.b16 %v639
        %v724 = vunpack.c.l.b16 %v640
        %v725 = vunpack.c.l.b16 %v641
        %v726 = vunpack.c.l.b16 %v642
        %v727 = vunpack.c.l.b16 %v643
        %v728 = vunpack.c.l.b16 %v644
        %v729 = vunpack.c.l.b16 %v645
        %v730 = vunpack.c.l.b16 %v646
        %v731 = vunpack.c.l.b16 %v647
        %v732 = vunpack.c.l.b16 %v648
        %v733 = vunpack.c.l.b16 %v649
        %v734 = vunpack.c.l.b16 %v650
        %v735 = vunpack.c.l.b16 %v651
        %v736 = vunpack.c.l.b16 %v652
        %v737 = vunpack.c.l.b16 %v653
        %v738 = vunpack.c.l.b16 %v654
        %v739 = vunpack.c.l.b16 %v655
        %v740 = vunpack.c.l.b16 %v656
        %v741 = vunpack.c.l.b16 %v657
        %v742 = vunpack.c.l.b16 %v658
        %v743 = vunpack.c.l.b16 %v659
        %v744 = vunpack.c.l.b16 %v660
        %v745 = vunpack.c.l.b16 %v661
        %v746 = vpack.c.b16 %v715, %v714
        %v747 = vpack.c.b16 %v717, %v716
        %v748 = vpack.c.b16 %v719, %v718
        %v749 = vpack.c.b16 %v721, %v720
        %v750 = vpack.c.b16 %v723, %v722
        %v751 = vpack.c.b16 %v725, %v724
        %v752 = vpack.c.b16 %v727, %v726
        %v753 = vpack.c.b16 %v729, %v728
        %v754 = vpack.c.b16 %v731, %v730
        %v755 = vpack.c.b16 %v733, %v732
        %v756 = vpack.c.b16 %v735, %v734
        %v757 = vpack.c.b16 %v737, %v736
        %v758 = vpack.c.b16 %v739, %v738
        %v759 = vpack.c.b16 %v741, %v740
        %v760 = vpack.c.b16 %v743, %v742
        %v761 = vpack.c.b16 %v745, %v744
        %v794 = vunpack.c.l.b16 %v666
        %v795 = vunpack.c.l.b16 %v667
        %v796 = vunpack.c.l.b16 %v668
        %v797 = vunpack.c.l.b16 %v669
        %v798 = vunpack.c.l.b16 %v670
        %v799 = vunpack.c.l.b16 %v671
        %v800 = vunpack.c.l.b16 %v672
        %v801 = vunpack.c.l.b16 %v673
        %v802 = vunpack.c.l.b16 %v674
        %v803 = vunpack.c.l.b16 %v675
        %v804 = vunpack.c.l.b16 %v676
        %v805 = vunpack.c.l.b16 %v677
        %v806 = vunpack.c.l.b16 %v678
        %v807 = vunpack.c.l.b16 %v679
        %v808 = vunpack.c.l.b16 %v680
        %v809 = vunpack.c.l.b16 %v681
        %v810 = vpack.c.b16 %v795, %v794
        %v811 = vpack.c.b16 %v797, %v796
        %v812 = vpack.c.b16 %v799, %v798
        %v813 = vpack.c.b16 %v801, %v800
        %v814 = vpack.c.b16 %v803, %v802
        %v815 = vpack.c.b16 %v805, %v804
        %v816 = vpack.c.b16 %v807, %v806
        %v817 = vpack.c.b16 %v809, %v808
        %826 = vmatprep.subr.bf16.mxu0 0
        %827 = vmatpush1.bf16.msra.mxu0 %v810
        %828 = vmatprep.subr.bf16.mxu0 0
        %829 = vmatpush1.bf16.msra.mxu0 %v811
        %830 = vmatprep.subr.bf16.mxu0 0
        %831 = vmatpush1.bf16.msra.mxu0 %v812
        %832 = vmatprep.subr.bf16.mxu0 0
        %833 = vmatpush1.bf16.msra.mxu0 %v813
        %834 = vmatprep.subr.bf16.mxu0 0
        %835 = vmatpush1.bf16.msra.mxu0 %v814
        %836 = vmatprep.subr.bf16.mxu0 0
        %837 = vmatpush1.bf16.msra.mxu0 %v815
        %838 = vmatprep.subr.bf16.mxu0 0
        %839 = vmatpush1.bf16.msra.mxu0 %v816
        %840 = vmatprep.subr.bf16.mxu0 0
        %841 = vmatpush1.bf16.msra.mxu0 %v817
        %842 = vmatprep.subr.bf16.mxu0 0
        %843 = vmatpush1.bf16.msra.mxu0 0
        %844 = vmatprep.subr.bf16.mxu0 0
        %845 = vmatpush1.bf16.msra.mxu0 0
        %846 = vmatprep.subr.bf16.mxu0 0
        %847 = vmatpush1.bf16.msra.mxu0 0
        %848 = vmatprep.subr.bf16.mxu0 0
        %849 = vmatpush1.bf16.msra.mxu0 0
        %850 = vmatprep.subr.bf16.mxu0 0
        %851 = vmatpush1.bf16.msra.mxu0 0
        %852 = vmatprep.subr.bf16.mxu0 0
        %853 = vmatpush1.bf16.msra.mxu0 0
        %854 = vmatprep.subr.bf16.mxu0 0
        %855 = vmatpush1.bf16.msra.mxu0 0
        %856 = vmatprep.subr.bf16.mxu0 0
        %857 = vmatpush1.bf16.msra.mxu0 0
        %858 = vmatprep.mubr.bf16.mxu0 0
        %859 = vmatmul.mubr.bf16.gmra.mrb[0].mxu0 %v746
        %v860 = vpop.f32.mrb[0].mxu0
        %v861 = vadd.f32 0.0, %v860
        %v862 = vpop.f32.mrb[0].mxu0
        %v863 = vpop.f32.mrb[0].mxu0
        %v864 = vadd.f32 0.0, %v863
        %v865 = vpop.f32.mrb[0].mxu0
        %866 = vmatprep.mubr.bf16.mxu0 0
        %867 = vmatmul.mubr.bf16.gmra.mrb[0].mxu0 %v747
        %v868 = vpop.f32.mrb[0].mxu0
        %v869 = vadd.f32 0.0, %v868
        %v870 = vpop.f32.mrb[0].mxu0
        %v871 = vpop.f32.mrb[0].mxu0
        %v872 = vadd.f32 0.0, %v871
        %v873 = vpop.f32.mrb[0].mxu0
        %874 = vmatprep.mubr.bf16.mxu0 0
        %875 = vmatmul.mubr.bf16.gmra.mrb[0].mxu0 %v748
        %v876 = vpop.f32.mrb[0].mxu0
        %v877 = vadd.f32 0.0, %v876
        %v878 = vpop.f32.mrb[0].mxu0
        %v879 = vpop.f32.mrb[0].mxu0
        %v880 = vadd.f32 0.0, %v879
        %v881 = vpop.f32.mrb[0].mxu0
        %882 = vmatprep.mubr.bf16.mxu0 0
        %883 = vmatmul.mubr.bf16.gmra.mrb[0].mxu0 %v749
        %v884 = vpop.f32.mrb[0].mxu0
        %v885 = vadd.f32 0.0, %v884
        %v886 = vpop.f32.mrb[0].mxu0
        %v887 = vpop.f32.mrb[0].mxu0
        %v888 = vadd.f32 0.0, %v887
        %v889 = vpop.f32.mrb[0].mxu0
        %890 = vmatprep.mubr.bf16.mxu0 0
        %891 = vmatmul.mubr.bf16.gmra.mrb[0].mxu0 %v750
        %v892 = vpop.f32.mrb[0].mxu0
        %v893 = vadd.f32 0.0, %v892
        %v894 = vpop.f32.mrb[0].mxu0
        %v895 = vpop.f32.mrb[0].mxu0
        %v896 = vadd.f32 0.0, %v895
        %v897 = vpop.f32.mrb[0].mxu0
        %898 = vmatprep.mubr.bf16.mxu0 0
        %899 = vmatmul.mubr.bf16.gmra.mrb[0].mxu0 %v751
        %v900 = vpop.f32.mrb[0].mxu0
        %v901 = vadd.f32 0.0, %v900
        %v902 = vpop.f32.mrb[0].mxu0
        %v903 = vpop.f32.mrb[0].mxu0
        %v904 = vadd.f32 0.0, %v903
        %v905 = vpop.f32.mrb[0].mxu0
        %906 = vmatprep.mubr.bf16.mxu0 0
        %907 = vmatmul.mubr.bf16.gmra.mrb[0].mxu0 %v752
        %v908 = vpop.f32.mrb[0].mxu0
        %v909 = vadd.f32 0.0, %v908
        %v910 = vpop.f32.mrb[0].mxu0
        %v911 = vpop.f32.mrb[0].mxu0
        %v912 = vadd.f32 0.0, %v911
        %v913 = vpop.f32.mrb[0].mxu0
        %914 = vmatprep.mubr.bf16.mxu0 0
        %915 = vmatmul.mubr.bf16.gmra.mrb[0].mxu0 %v753
        %v916 = vpop.f32.mrb[0].mxu0
        %v917 = vadd.f32 0.0, %v916
        %v918 = vpop.f32.mrb[0].mxu0
        %v919 = vpop.f32.mrb[0].mxu0
        %v920 = vadd.f32 0.0, %v919
        %v921 = vpop.f32.mrb[0].mxu0
        %922 = vmatprep.mubr.bf16.mxu0 0
        %923 = vmatmul.mubr.bf16.gmra.mrb[0].mxu0 %v754
        %v924 = vpop.f32.mrb[0].mxu0
        %v925 = vadd.f32 0.0, %v924
        %v926 = vpop.f32.mrb[0].mxu0
        %v927 = vpop.f32.mrb[0].mxu0
        %v928 = vadd.f32 0.0, %v927
        %v929 = vpop.f32.mrb[0].mxu0
        %930 = vmatprep.mubr.bf16.mxu0 0
        %931 = vmatmul.mubr.bf16.gmra.mrb[0].mxu0 %v755
        %v932 = vpop.f32.mrb[0].mxu0
        %v933 = vadd.f32 0.0, %v932
        %v934 = vpop.f32.mrb[0].mxu0
        %v935 = vpop.f32.mrb[0].mxu0
        %v936 = vadd.f32 0.0, %v935
        %v937 = vpop.f32.mrb[0].mxu0
        %938 = vmatprep.mubr.bf16.mxu0 0
        %939 = vmatmul.mubr.bf16.gmra.mrb[0].mxu0 %v756
        %v940 = vpop.f32.mrb[0].mxu0
        %v941 = vadd.f32 0.0, %v940
        %v942 = vpop.f32.mrb[0].mxu0
        %v943 = vpop.f32.mrb[0].mxu0
        %v944 = vadd.f32 0.0, %v943
        %v945 = vpop.f32.mrb[0].mxu0
        %946 = vmatprep.mubr.bf16.mxu0 0
        %947 = vmatmul.mubr.bf16.gmra.mrb[0].mxu0 %v757
        %v948 = vpop.f32.mrb[0].mxu0
        %v949 = vadd.f32 0.0, %v948
        %v950 = vpop.f32.mrb[0].mxu0
        %v951 = vpop.f32.mrb[0].mxu0
        %v952 = vadd.f32 0.0, %v951
        %v953 = vpop.f32.mrb[0].mxu0
        %954 = vmatprep.mubr.bf16.mxu0 0
        %955 = vmatmul.mubr.bf16.gmra.mrb[0].mxu0 %v758
        %v956 = vpop.f32.mrb[0].mxu0
        %v957 = vadd.f32 0.0, %v956
        %v958 = vpop.f32.mrb[0].mxu0
        %v959 = vpop.f32.mrb[0].mxu0
        %v960 = vadd.f32 0.0, %v959
        %v961 = vpop.f32.mrb[0].mxu0
        %962 = vmatprep.mubr.bf16.mxu0 0
        %963 = vmatmul.mubr.bf16.gmra.mrb[0].mxu0 %v759
        %v964 = vpop.f32.mrb[0].mxu0
        %v965 = vadd.f32 0.0, %v964
        %v966 = vpop.f32.mrb[0].mxu0
        %v967 = vpop.f32.mrb[0].mxu0
        %v968 = vadd.f32 0.0, %v967
        %v969 = vpop.f32.mrb[0].mxu0
        %970 = vmatprep.mubr.bf16.mxu0 0
        %971 = vmatmul.mubr.bf16.gmra.mrb[0].mxu0 %v760
        %v972 = vpop.f32.mrb[0].mxu0
        %v973 = vadd.f32 0.0, %v972
        %v974 = vpop.f32.mrb[0].mxu0
        %v975 = vpop.f32.mrb[0].mxu0
        %v976 = vadd.f32 0.0, %v975
        %v977 = vpop.f32.mrb[0].mxu0
        %978 = vmatprep.mubr.bf16.mxu0 0
        %979 = vmatmul.mubr.bf16.gmra.mrb[0].mxu0 %v761
        %v980 = vpop.f32.mrb[0].mxu0
        %v981 = vadd.f32 0.0, %v980
        %v982 = vpop.f32.mrb[0].mxu0
        %v983 = vpop.f32.mrb[0].mxu0
        %v984 = vadd.f32 0.0, %v983
        %v985 = vpop.f32.mrb[0].mxu0
        %986 = vdwg.mxu0
        %v987 = vlaneseq
        %v988 = vshrl.u32 %v987, 7
        %v989 = vsub.s32 0, %v988
        %v990 = vrot.slane %v628, %v989
        %992 = vbcast.lane.b32.xlu0 %v990, 256
        %v993 = vpop.permute.xlu0 %992
        %s995 = sor.u32 256, 8
        %996 = vbcast.lane.b32.xlu0 %v990, %s995
        %v997 = vpop.permute.xlu0 %996
        %v998 = vlaneseq
        %v999 = vshrl.u32 %v998, 7
        %v1000 = vsub.s32 1, %v999
        %v1001 = vrot.slane %v628, %v1000
        %1003 = vbcast.lane.b32.xlu0 %v1001, 256
        %v1004 = vpop.permute.xlu0 %1003
        %s1006 = sor.u32 256, 8
        %1007 = vbcast.lane.b32.xlu0 %v1001, %s1006
        %v1008 = vpop.permute.xlu0 %1007
        %v1009 = vlaneseq
        %v1010 = vshrl.u32 %v1009, 7
        %v1011 = vsub.s32 2, %v1010
        %v1012 = vrot.slane %v628, %v1011
        %1014 = vbcast.lane.b32.xlu0 %v1012, 256
        %v1015 = vpop.permute.xlu0 %1014
        %s1017 = sor.u32 256, 8
        %1018 = vbcast.lane.b32.xlu0 %v1012, %s1017
        %v1019 = vpop.permute.xlu0 %1018
        %v1020 = vlaneseq
        %v1021 = vshrl.u32 %v1020, 7
        %v1022 = vsub.s32 3, %v1021
        %v1023 = vrot.slane %v628, %v1022
        %1025 = vbcast.lane.b32.xlu0 %v1023, 256
        %v1026 = vpop.permute.xlu0 %1025
        %s1028 = sor.u32 256, 8
        %1029 = vbcast.lane.b32.xlu0 %v1023, %s1028
        %v1030 = vpop.permute.xlu0 %1029
        %v1031 = vlaneseq
        %v1032 = vshrl.u32 %v1031, 7
        %v1033 = vsub.s32 4, %v1032
        %v1034 = vrot.slane %v628, %v1033
        %1036 = vbcast.lane.b32.xlu0 %v1034, 256
        %v1037 = vpop.permute.xlu0 %1036
        %s1039 = sor.u32 256, 8
        %1040 = vbcast.lane.b32.xlu0 %v1034, %s1039
        %v1041 = vpop.permute.xlu0 %1040
        %v1042 = vlaneseq
        %v1043 = vshrl.u32 %v1042, 7
        %v1044 = vsub.s32 5, %v1043
        %v1045 = vrot.slane %v628, %v1044
        %1047 = vbcast.lane.b32.xlu0 %v1045, 256
        %v1048 = vpop.permute.xlu0 %1047
        %s1050 = sor.u32 256, 8
        %1051 = vbcast.lane.b32.xlu0 %v1045, %s1050
        %v1052 = vpop.permute.xlu0 %1051
        %v1053 = vlaneseq
        %v1054 = vshrl.u32 %v1053, 7
        %v1055 = vsub.s32 6, %v1054
        %v1056 = vrot.slane %v628, %v1055
        %1058 = vbcast.lane.b32.xlu0 %v1056, 256
        %v1059 = vpop.permute.xlu0 %1058
        %s1061 = sor.u32 256, 8
        %1062 = vbcast.lane.b32.xlu0 %v1056, %s1061
        %v1063 = vpop.permute.xlu0 %1062
        %v1064 = vlaneseq
        %v1065 = vshrl.u32 %v1064, 7
        %v1066 = vsub.s32 7, %v1065
        %v1067 = vrot.slane %v628, %v1066
        %1069 = vbcast.lane.b32.xlu0 %v1067, 256
        %v1070 = vpop.permute.xlu0 %1069
        %s1072 = sor.u32 256, 8
        %1073 = vbcast.lane.b32.xlu0 %v1067, %s1072
        %v1074 = vpop.permute.xlu0 %1073
        %v1075 = vlaneseq
        %v1076 = vshrl.u32 %v1075, 7
        %v1077 = vsub.s32 0, %v1076
        %v1078 = vrot.slane %v629, %v1077
        %1080 = vbcast.lane.b32.xlu0 %v1078, 256
        %v1081 = vpop.permute.xlu0 %1080
        %s1083 = sor.u32 256, 8
        %1084 = vbcast.lane.b32.xlu0 %v1078, %s1083
        %v1085 = vpop.permute.xlu0 %1084
        %v1086 = vlaneseq
        %v1087 = vshrl.u32 %v1086, 7
        %v1088 = vsub.s32 1, %v1087
        %v1089 = vrot.slane %v629, %v1088
        %1091 = vbcast.lane.b32.xlu0 %v1089, 256
        %v1092 = vpop.permute.xlu0 %1091
        %s1094 = sor.u32 256, 8
        %1095 = vbcast.lane.b32.xlu0 %v1089, %s1094
        %v1096 = vpop.permute.xlu0 %1095
        %v1097 = vlaneseq
        %v1098 = vshrl.u32 %v1097, 7
        %v1099 = vsub.s32 2, %v1098
        %v1100 = vrot.slane %v629, %v1099
        %1102 = vbcast.lane.b32.xlu0 %v1100, 256
        %v1103 = vpop.permute.xlu0 %1102
        %s1105 = sor.u32 256, 8
        %1106 = vbcast.lane.b32.xlu0 %v1100, %s1105
        %v1107 = vpop.permute.xlu0 %1106
        %v1108 = vlaneseq
        %v1109 = vshrl.u32 %v1108, 7
        %v1110 = vsub.s32 3, %v1109
        %v1111 = vrot.slane %v629, %v1110
        %1113 = vbcast.lane.b32.xlu0 %v1111, 256
        %v1114 = vpop.permute.xlu0 %1113
        %s1116 = sor.u32 256, 8
        %1117 = vbcast.lane.b32.xlu0 %v1111, %s1116
        %v1118 = vpop.permute.xlu0 %1117
        %v1119 = vlaneseq
        %v1120 = vshrl.u32 %v1119, 7
        %v1121 = vsub.s32 4, %v1120
        %v1122 = vrot.slane %v629, %v1121
        %1124 = vbcast.lane.b32.xlu0 %v1122, 256
        %v1125 = vpop.permute.xlu0 %1124
        %s1127 = sor.u32 256, 8
        %1128 = vbcast.lane.b32.xlu0 %v1122, %s1127
        %v1129 = vpop.permute.xlu0 %1128
        %v1130 = vlaneseq
        %v1131 = vshrl.u32 %v1130, 7
        %v1132 = vsub.s32 5, %v1131
        %v1133 = vrot.slane %v629, %v1132
        %1135 = vbcast.lane.b32.xlu0 %v1133, 256
        %v1136 = vpop.permute.xlu0 %1135
        %s1138 = sor.u32 256, 8
        %1139 = vbcast.lane.b32.xlu0 %v1133, %s1138
        %v1140 = vpop.permute.xlu0 %1139
        %v1141 = vlaneseq
        %v1142 = vshrl.u32 %v1141, 7
        %v1143 = vsub.s32 6, %v1142
        %v1144 = vrot.slane %v629, %v1143
        %1146 = vbcast.lane.b32.xlu0 %v1144, 256
        %v1147 = vpop.permute.xlu0 %1146
        %s1149 = sor.u32 256, 8
        %1150 = vbcast.lane.b32.xlu0 %v1144, %s1149
        %v1151 = vpop.permute.xlu0 %1150
        %v1152 = vlaneseq
        %v1153 = vshrl.u32 %v1152, 7
        %v1154 = vsub.s32 7, %v1153
        %v1155 = vrot.slane %v629, %v1154
        %1157 = vbcast.lane.b32.xlu0 %v1155, 256
        %v1158 = vpop.permute.xlu0 %1157
        %s1160 = sor.u32 256, 8
        %1161 = vbcast.lane.b32.xlu0 %v1155, %s1160
        %v1162 = vpop.permute.xlu0 %1161
        %v1163 = vmul.f32 %v993, %v662
        %v1164 = vmul.f32 %v997, %v663
        %v1165 = vmul.f32 %v1004, %v662
        %v1166 = vmul.f32 %v1008, %v663
        %v1167 = vmul.f32 %v1015, %v662
        %v1168 = vmul.f32 %v1019, %v663
        %v1169 = vmul.f32 %v1026, %v662
        %v1170 = vmul.f32 %v1030, %v663
        %v1171 = vmul.f32 %v1037, %v662
        %v1172 = vmul.f32 %v1041, %v663
        %v1173 = vmul.f32 %v1048, %v662
        %v1174 = vmul.f32 %v1052, %v663
        %v1175 = vmul.f32 %v1059, %v662
        %v1176 = vmul.f32 %v1063, %v663
        %v1177 = vmul.f32 %v1070, %v662
        %v1178 = vmul.f32 %v1074, %v663
        %v1179 = vmul.f32 %v1081, %v662
        %v1180 = vmul.f32 %v1085, %v663
        %v1181 = vmul.f32 %v1092, %v662
        %v1182 = vmul.f32 %v1096, %v663
        %v1183 = vmul.f32 %v1103, %v662
        %v1184 = vmul.f32 %v1107, %v663
        %v1185 = vmul.f32 %v1114, %v662
        %v1186 = vmul.f32 %v1118, %v663
        %v1187 = vmul.f32 %v1125, %v662
        %v1188 = vmul.f32 %v1129, %v663
        %v1189 = vmul.f32 %v1136, %v662
        %v1190 = vmul.f32 %v1140, %v663
        %v1191 = vmul.f32 %v1147, %v662
        %v1192 = vmul.f32 %v1151, %v663
        %v1193 = vmul.f32 %v1158, %v662
        %v1194 = vmul.f32 %v1162, %v663
        %v1195 = vadd.f32 %v861, %v1163
        %v1196 = vadd.f32 %v864, %v1164
        %v1197 = vadd.f32 %v869, %v1165
        %v1198 = vadd.f32 %v872, %v1166
        %v1199 = vadd.f32 %v877, %v1167
        %v1200 = vadd.f32 %v880, %v1168
        %v1201 = vadd.f32 %v885, %v1169
        %v1202 = vadd.f32 %v888, %v1170
        %v1203 = vadd.f32 %v893, %v1171
        %v1204 = vadd.f32 %v896, %v1172
        %v1205 = vadd.f32 %v901, %v1173
        %v1206 = vadd.f32 %v904, %v1174
        %v1207 = vadd.f32 %v909, %v1175
        %v1208 = vadd.f32 %v912, %v1176
        %v1209 = vadd.f32 %v917, %v1177
        %v1210 = vadd.f32 %v920, %v1178
        %v1211 = vadd.f32 %v925, %v1179
        %v1212 = vadd.f32 %v928, %v1180
        %v1213 = vadd.f32 %v933, %v1181
        %v1214 = vadd.f32 %v936, %v1182
        %v1215 = vadd.f32 %v941, %v1183
        %v1216 = vadd.f32 %v944, %v1184
        %v1217 = vadd.f32 %v949, %v1185
        %v1218 = vadd.f32 %v952, %v1186
        %v1219 = vadd.f32 %v957, %v1187
        %v1220 = vadd.f32 %v960, %v1188
        %v1221 = vadd.f32 %v965, %v1189
        %v1222 = vadd.f32 %v968, %v1190
        %v1223 = vadd.f32 %v973, %v1191
        %v1224 = vadd.f32 %v976, %v1192
        %v1225 = vadd.f32 %v981, %v1193
        %v1226 = vadd.f32 %v984, %v1194
        %v1227 = vld [vmem:[%s6] sm:$0x1]
        %v1229 = vlaneseq
        %v1230 = vshrl.u32 %v1229, 7
        %v1231 = vsub.s32 0, %v1230
        %v1232 = vrot.slane %v1227, %v1231
        %v1234 = vadd.f32 %v1195, %v1232
        %v1235 = vadd.f32 %v1196, %v1232
        %v1236 = vadd.f32 %v1197, %v1232
        %v1237 = vadd.f32 %v1198, %v1232
        %v1238 = vadd.f32 %v1199, %v1232
        %v1239 = vadd.f32 %v1200, %v1232
        %v1240 = vadd.f32 %v1201, %v1232
        %v1241 = vadd.f32 %v1202, %v1232
        %v1242 = vadd.f32 %v1203, %v1232
        %v1243 = vadd.f32 %v1204, %v1232
        %v1244 = vadd.f32 %v1205, %v1232
        %v1245 = vadd.f32 %v1206, %v1232
        %v1246 = vadd.f32 %v1207, %v1232
        %v1247 = vadd.f32 %v1208, %v1232
        %v1248 = vadd.f32 %v1209, %v1232
        %v1249 = vadd.f32 %v1210, %v1232
        %v1250 = vadd.f32 %v1211, %v1232
        %v1251 = vadd.f32 %v1212, %v1232
        %v1252 = vadd.f32 %v1213, %v1232
        %v1253 = vadd.f32 %v1214, %v1232
        %v1254 = vadd.f32 %v1215, %v1232
        %v1255 = vadd.f32 %v1216, %v1232
        %v1256 = vadd.f32 %v1217, %v1232
        %v1257 = vadd.f32 %v1218, %v1232
        %v1258 = vadd.f32 %v1219, %v1232
        %v1259 = vadd.f32 %v1220, %v1232
        %v1260 = vadd.f32 %v1221, %v1232
        %v1261 = vadd.f32 %v1222, %v1232
        %v1262 = vadd.f32 %v1223, %v1232
        %v1263 = vadd.f32 %v1224, %v1232
        %v1264 = vadd.f32 %v1225, %v1232
        %v1265 = vadd.f32 %v1226, %v1232
        %v1266 = vmax.f32 %v1234, 0.0
        %v1267 = vmax.f32 %v1235, 0.0
        %v1268 = vmax.f32 %v1236, 0.0
        %v1269 = vmax.f32 %v1237, 0.0
        %v1270 = vmax.f32 %v1238, 0.0
        %v1271 = vmax.f32 %v1239, 0.0
        %v1272 = vmax.f32 %v1240, 0.0
        %v1273 = vmax.f32 %v1241, 0.0
        %v1274 = vmax.f32 %v1242, 0.0
        %v1275 = vmax.f32 %v1243, 0.0
        %v1276 = vmax.f32 %v1244, 0.0
        %v1277 = vmax.f32 %v1245, 0.0
        %v1278 = vmax.f32 %v1246, 0.0
        %v1279 = vmax.f32 %v1247, 0.0
        %v1280 = vmax.f32 %v1248, 0.0
        %v1281 = vmax.f32 %v1249, 0.0
        %v1282 = vmax.f32 %v1250, 0.0
        %v1283 = vmax.f32 %v1251, 0.0
        %v1284 = vmax.f32 %v1252, 0.0
        %v1285 = vmax.f32 %v1253, 0.0
        %v1286 = vmax.f32 %v1254, 0.0
        %v1287 = vmax.f32 %v1255, 0.0
        %v1288 = vmax.f32 %v1256, 0.0
        %v1289 = vmax.f32 %v1257, 0.0
        %v1290 = vmax.f32 %v1258, 0.0
        %v1291 = vmax.f32 %v1259, 0.0
        %v1292 = vmax.f32 %v1260, 0.0
        %v1293 = vmax.f32 %v1261, 0.0
        %v1294 = vmax.f32 %v1262, 0.0
        %v1295 = vmax.f32 %v1263, 0.0
        %v1296 = vmax.f32 %v1264, 0.0
        %v1297 = vmax.f32 %v1265, 0.0
        %v1298 = vpack.c.bf16 %v1267, %v1266
        %v1299 = vpack.c.bf16 %v1269, %v1268
        %v1300 = vpack.c.bf16 %v1271, %v1270
        %v1301 = vpack.c.bf16 %v1273, %v1272
        %v1302 = vpack.c.bf16 %v1275, %v1274
        %v1303 = vpack.c.bf16 %v1277, %v1276
        %v1304 = vpack.c.bf16 %v1279, %v1278
        %v1305 = vpack.c.bf16 %v1281, %v1280
        %v1306 = vpack.c.bf16 %v1283, %v1282
        %v1307 = vpack.c.bf16 %v1285, %v1284
        %v1308 = vpack.c.bf16 %v1287, %v1286
        %v1309 = vpack.c.bf16 %v1289, %v1288
        %v1310 = vpack.c.bf16 %v1291, %v1290
        %v1311 = vpack.c.bf16 %v1293, %v1292
        %v1312 = vpack.c.bf16 %v1295, %v1294
        %v1313 = vpack.c.bf16 %v1297, %v1296
        %v1314 = vld [vmem:[#allocation10] sm:$0xf]
        %v1315 = vld [vmem:[#allocation10 + $0x4] sm:$0xf]
        %v1316 = vld [vmem:[#allocation10 + $0x8] sm:$0xf]
        %v1317 = vld [vmem:[#allocation10 + $0xc] sm:$0xf]
        %v1318 = vld [vmem:[#allocation10 + $0x10] sm:$0xf]
        %v1319 = vld [vmem:[#allocation10 + $0x14] sm:$0xf]
        %v1320 = vld [vmem:[#allocation10 + $0x18] sm:$0xf]
        %v1321 = vld [vmem:[#allocation10 + $0x1c] sm:$0xf]
        %v1322 = vld [vmem:[#allocation10 + $0x20] sm:$0xf]
        %v1323 = vld [vmem:[#allocation10 + $0x24] sm:$0xf]
        %v1324 = vld [vmem:[#allocation10 + $0x28] sm:$0xf]
        %v1325 = vld [vmem:[#allocation10 + $0x2c] sm:$0xf]
        %v1326 = vld [vmem:[#allocation10 + $0x30] sm:$0xf]
        %v1327 = vld [vmem:[#allocation10 + $0x34] sm:$0xf]
        %v1328 = vld [vmem:[#allocation10 + $0x38] sm:$0xf]
        %v1329 = vld [vmem:[#allocation10 + $0x3c] sm:$0xf]
        %v1346 = vunpack.c.l.b16 %v1314
        %v1347 = vunpack.c.l.b16 %v1315
        %v1348 = vunpack.c.l.b16 %v1316
        %v1349 = vunpack.c.l.b16 %v1317
        %v1350 = vunpack.c.l.b16 %v1318
        %v1351 = vunpack.c.l.b16 %v1319
        %v1352 = vunpack.c.l.b16 %v1320
        %v1353 = vunpack.c.l.b16 %v1321
        %v1354 = vunpack.c.l.b16 %v1322
        %v1355 = vunpack.c.l.b16 %v1323
        %v1356 = vunpack.c.l.b16 %v1324
        %v1357 = vunpack.c.l.b16 %v1325
        %v1358 = vunpack.c.l.b16 %v1326
        %v1359 = vunpack.c.l.b16 %v1327
        %v1360 = vunpack.c.l.b16 %v1328
        %v1361 = vunpack.c.l.b16 %v1329
        %v1362 = vpack.c.b16 %v1347, %v1346
        %v1363 = vpack.c.b16 %v1349, %v1348
        %v1364 = vpack.c.b16 %v1351, %v1350
        %v1365 = vpack.c.b16 %v1353, %v1352
        %v1366 = vpack.c.b16 %v1355, %v1354
        %v1367 = vpack.c.b16 %v1357, %v1356
        %v1368 = vpack.c.b16 %v1359, %v1358
        %v1369 = vpack.c.b16 %v1361, %v1360
        %1378 = vmatprep.subr.bf16.mxu0 0
        %1379 = vmatpush1.bf16.msra.mxu0 %v1362
        %1380 = vmatprep.subr.bf16.mxu0 0
        %1381 = vmatpush1.bf16.msra.mxu0 %v1363
        %1382 = vmatprep.subr.bf16.mxu0 0
        %1383 = vmatpush1.bf16.msra.mxu0 %v1364
        %1384 = vmatprep.subr.bf16.mxu0 0
        %1385 = vmatpush1.bf16.msra.mxu0 %v1365
        %1386 = vmatprep.subr.bf16.mxu0 0
        %1387 = vmatpush1.bf16.msra.mxu0 %v1366
        %1388 = vmatprep.subr.bf16.mxu0 0
        %1389 = vmatpush1.bf16.msra.mxu0 %v1367
        %1390 = vmatprep.subr.bf16.mxu0 0
        %1391 = vmatpush1.bf16.msra.mxu0 %v1368
        %1392 = vmatprep.subr.bf16.mxu0 0
        %1393 = vmatpush1.bf16.msra.mxu0 %v1369
        %1394 = vmatprep.subr.bf16.mxu0 0
        %1395 = vmatpush1.bf16.msra.mxu0 0
        %1396 = vmatprep.subr.bf16.mxu0 0
        %1397 = vmatpush1.bf16.msra.mxu0 0
        %1398 = vmatprep.subr.bf16.mxu0 0
        %1399 = vmatpush1.bf16.msra.mxu0 0
        %1400 = vmatprep.subr.bf16.mxu0 0
        %1401 = vmatpush1.bf16.msra.mxu0 0
        %1402 = vmatprep.subr.bf16.mxu0 0
        %1403 = vmatpush1.bf16.msra.mxu0 0
        %1404 = vmatprep.subr.bf16.mxu0 0
        %1405 = vmatpush1.bf16.msra.mxu0 0
        %1406 = vmatprep.subr.bf16.mxu0 0
        %1407 = vmatpush1.bf16.msra.mxu0 0
        %1408 = vmatprep.subr.bf16.mxu0 0
        %1409 = vmatpush1.bf16.msra.mxu0 0
        %1410 = vmatprep.mubr.bf16.mxu0 0
        %1411 = vmatmul.mubr.bf16.gmra.mrb[0].mxu0 %v1298
        %v1412 = vpop.f32.mrb[0].mxu0
        %v1413 = vadd.f32 0.0, %v1412
        %v1414 = vpop.f32.mrb[0].mxu0
        %v1415 = vpop.f32.mrb[0].mxu0
        %v1416 = vadd.f32 0.0, %v1415
        %v1417 = vpop.f32.mrb[0].mxu0
        %1418 = vmatprep.mubr.bf16.mxu0 0
        %1419 = vmatmul.mubr.bf16.gmra.mrb[0].mxu0 %v1299
        %v1420 = vpop.f32.mrb[0].mxu0
        %v1421 = vadd.f32 0.0, %v1420
        %v1422 = vpop.f32.mrb[0].mxu0
        %v1423 = vpop.f32.mrb[0].mxu0
        %v1424 = vadd.f32 0.0, %v1423
        %v1425 = vpop.f32.mrb[0].mxu0
        %1426 = vmatprep.mubr.bf16.mxu0 0
        %1427 = vmatmul.mubr.bf16.gmra.mrb[0].mxu0 %v1300
        %v1428 = vpop.f32.mrb[0].mxu0
        %v1429 = vadd.f32 0.0, %v1428
        %v1430 = vpop.f32.mrb[0].mxu0
        %v1431 = vpop.f32.mrb[0].mxu0
        %v1432 = vadd.f32 0.0, %v1431
        %v1433 = vpop.f32.mrb[0].mxu0
        %1434 = vmatprep.mubr.bf16.mxu0 0
        %1435 = vmatmul.mubr.bf16.gmra.mrb[0].mxu0 %v1301
        %v1436 = vpop.f32.mrb[0].mxu0
        %v1437 = vadd.f32 0.0, %v1436
        %v1438 = vpop.f32.mrb[0].mxu0
        %v1439 = vpop.f32.mrb[0].mxu0
        %v1440 = vadd.f32 0.0, %v1439
        %v1441 = vpop.f32.mrb[0].mxu0
        %1442 = vmatprep.mubr.bf16.mxu0 0
        %1443 = vmatmul.mubr.bf16.gmra.mrb[0].mxu0 %v1302
        %v1444 = vpop.f32.mrb[0].mxu0
        %v1445 = vadd.f32 0.0, %v1444
        %v1446 = vpop.f32.mrb[0].mxu0
        %v1447 = vpop.f32.mrb[0].mxu0
        %v1448 = vadd.f32 0.0, %v1447
        %v1449 = vpop.f32.mrb[0].mxu0
        %1450 = vmatprep.mubr.bf16.mxu0 0
        %1451 = vmatmul.mubr.bf16.gmra.mrb[0].mxu0 %v1303
        %v1452 = vpop.f32.mrb[0].mxu0
        %v1453 = vadd.f32 0.0, %v1452
        %v1454 = vpop.f32.mrb[0].mxu0
        %v1455 = vpop.f32.mrb[0].mxu0
        %v1456 = vadd.f32 0.0, %v1455
        %v1457 = vpop.f32.mrb[0].mxu0
        %1458 = vmatprep.mubr.bf16.mxu0 0
        %1459 = vmatmul.mubr.bf16.gmra.mrb[0].mxu0 %v1304
        %v1460 = vpop.f32.mrb[0].mxu0
        %v1461 = vadd.f32 0.0, %v1460
        %v1462 = vpop.f32.mrb[0].mxu0
        %v1463 = vpop.f32.mrb[0].mxu0
        %v1464 = vadd.f32 0.0, %v1463
        %v1465 = vpop.f32.mrb[0].mxu0
        %1466 = vmatprep.mubr.bf16.mxu0 0
        %1467 = vmatmul.mubr.bf16.gmra.mrb[0].mxu0 %v1305
        %v1468 = vpop.f32.mrb[0].mxu0
        %v1469 = vadd.f32 0.0, %v1468
        %v1470 = vpop.f32.mrb[0].mxu0
        %v1471 = vpop.f32.mrb[0].mxu0
        %v1472 = vadd.f32 0.0, %v1471
        %v1473 = vpop.f32.mrb[0].mxu0
        %1474 = vmatprep.mubr.bf16.mxu0 0
        %1475 = vmatmul.mubr.bf16.gmra.mrb[0].mxu0 %v1306
        %v1476 = vpop.f32.mrb[0].mxu0
        %v1477 = vadd.f32 0.0, %v1476
        %v1478 = vpop.f32.mrb[0].mxu0
        %v1479 = vpop.f32.mrb[0].mxu0
        %v1480 = vadd.f32 0.0, %v1479
        %v1481 = vpop.f32.mrb[0].mxu0
        %1482 = vmatprep.mubr.bf16.mxu0 0
        %1483 = vmatmul.mubr.bf16.gmra.mrb[0].mxu0 %v1307
        %v1484 = vpop.f32.mrb[0].mxu0
        %v1485 = vadd.f32 0.0, %v1484
        %v1486 = vpop.f32.mrb[0].mxu0
        %v1487 = vpop.f32.mrb[0].mxu0
        %v1488 = vadd.f32 0.0, %v1487
        %v1489 = vpop.f32.mrb[0].mxu0
        %1490 = vmatprep.mubr.bf16.mxu0 0
        %1491 = vmatmul.mubr.bf16.gmra.mrb[0].mxu0 %v1308
        %v1492 = vpop.f32.mrb[0].mxu0
        %v1493 = vadd.f32 0.0, %v1492
        %v1494 = vpop.f32.mrb[0].mxu0
        %v1495 = vpop.f32.mrb[0].mxu0
        %v1496 = vadd.f32 0.0, %v1495
        %v1497 = vpop.f32.mrb[0].mxu0
        %1498 = vmatprep.mubr.bf16.mxu0 0
        %1499 = vmatmul.mubr.bf16.gmra.mrb[0].mxu0 %v1309
        %v1500 = vpop.f32.mrb[0].mxu0
        %v1501 = vadd.f32 0.0, %v1500
        %v1502 = vpop.f32.mrb[0].mxu0
        %v1503 = vpop.f32.mrb[0].mxu0
        %v1504 = vadd.f32 0.0, %v1503
        %v1505 = vpop.f32.mrb[0].mxu0
        %1506 = vmatprep.mubr.bf16.mxu0 0
        %1507 = vmatmul.mubr.bf16.gmra.mrb[0].mxu0 %v1310
        %v1508 = vpop.f32.mrb[0].mxu0
        %v1509 = vadd.f32 0.0, %v1508
        %v1510 = vpop.f32.mrb[0].mxu0
        %v1511 = vpop.f32.mrb[0].mxu0
        %v1512 = vadd.f32 0.0, %v1511
        %v1513 = vpop.f32.mrb[0].mxu0
        %1514 = vmatprep.mubr.bf16.mxu0 0
        %1515 = vmatmul.mubr.bf16.gmra.mrb[0].mxu0 %v1311
        %v1516 = vpop.f32.mrb[0].mxu0
        %v1517 = vadd.f32 0.0, %v1516
        %v1518 = vpop.f32.mrb[0].mxu0
        %v1519 = vpop.f32.mrb[0].mxu0
        %v1520 = vadd.f32 0.0, %v1519
        %v1521 = vpop.f32.mrb[0].mxu0
        %1522 = vmatprep.mubr.bf16.mxu0 0
        %1523 = vmatmul.mubr.bf16.gmra.mrb[0].mxu0 %v1312
        %v1524 = vpop.f32.mrb[0].mxu0
        %v1525 = vadd.f32 0.0, %v1524
        %v1526 = vpop.f32.mrb[0].mxu0
        %v1527 = vpop.f32.mrb[0].mxu0
        %v1528 = vadd.f32 0.0, %v1527
        %v1529 = vpop.f32.mrb[0].mxu0
        %1530 = vmatprep.mubr.bf16.mxu0 0
        %1531 = vmatmul.mubr.bf16.gmra.mrb[0].mxu0 %v1313
        %v1532 = vpop.f32.mrb[0].mxu0
        %v1533 = vadd.f32 0.0, %v1532
        %v1534 = vpop.f32.mrb[0].mxu0
        %v1535 = vpop.f32.mrb[0].mxu0
        %v1536 = vadd.f32 0.0, %v1535
        %v1537 = vpop.f32.mrb[0].mxu0
        %1538 = vdwg.mxu0
        %v1539 = vld [vmem:[%s8] sm:$0x1]
        %v1541 = vlaneseq
        %v1542 = vshrl.u32 %v1541, 7
        %v1543 = vsub.s32 0, %v1542
        %v1544 = vrot.slane %v1539, %v1543
        %v1546 = vadd.f32 %v1413, %v1544
        %v1547 = vadd.f32 %v1416, %v1544
        %v1548 = vadd.f32 %v1421, %v1544
        %v1549 = vadd.f32 %v1424, %v1544
        %v1550 = vadd.f32 %v1429, %v1544
        %v1551 = vadd.f32 %v1432, %v1544
        %v1552 = vadd.f32 %v1437, %v1544
        %v1553 = vadd.f32 %v1440, %v1544
        %v1554 = vadd.f32 %v1445, %v1544
        %v1555 = vadd.f32 %v1448, %v1544
        %v1556 = vadd.f32 %v1453, %v1544
        %v1557 = vadd.f32 %v1456, %v1544
        %v1558 = vadd.f32 %v1461, %v1544
        %v1559 = vadd.f32 %v1464, %v1544
        %v1560 = vadd.f32 %v1469, %v1544
        %v1561 = vadd.f32 %v1472, %v1544
        %v1562 = vadd.f32 %v1477, %v1544
        %v1563 = vadd.f32 %v1480, %v1544
        %v1564 = vadd.f32 %v1485, %v1544
        %v1565 = vadd.f32 %v1488, %v1544
        %v1566 = vadd.f32 %v1493, %v1544
        %v1567 = vadd.f32 %v1496, %v1544
        %v1568 = vadd.f32 %v1501, %v1544
        %v1569 = vadd.f32 %v1504, %v1544
        %v1570 = vadd.f32 %v1509, %v1544
        %v1571 = vadd.f32 %v1512, %v1544
        %v1572 = vadd.f32 %v1517, %v1544
        %v1573 = vadd.f32 %v1520, %v1544
        %v1574 = vadd.f32 %v1525, %v1544
        %v1575 = vadd.f32 %v1528, %v1544
        %v1576 = vadd.f32 %v1533, %v1544
        %v1577 = vadd.f32 %v1536, %v1544
        %v1578 = vmax.f32 %v1546, 0.0
        %v1579 = vmax.f32 %v1547, 0.0
        %v1580 = vmax.f32 %v1548, 0.0
        %v1581 = vmax.f32 %v1549, 0.0
        %v1582 = vmax.f32 %v1550, 0.0
        %v1583 = vmax.f32 %v1551, 0.0
        %v1584 = vmax.f32 %v1552, 0.0
        %v1585 = vmax.f32 %v1553, 0.0
        %v1586 = vmax.f32 %v1554, 0.0
        %v1587 = vmax.f32 %v1555, 0.0
        %v1588 = vmax.f32 %v1556, 0.0
        %v1589 = vmax.f32 %v1557, 0.0
        %v1590 = vmax.f32 %v1558, 0.0
        %v1591 = vmax.f32 %v1559, 0.0
        %v1592 = vmax.f32 %v1560, 0.0
        %v1593 = vmax.f32 %v1561, 0.0
        %v1594 = vmax.f32 %v1562, 0.0
        %v1595 = vmax.f32 %v1563, 0.0
        %v1596 = vmax.f32 %v1564, 0.0
        %v1597 = vmax.f32 %v1565, 0.0
        %v1598 = vmax.f32 %v1566, 0.0
        %v1599 = vmax.f32 %v1567, 0.0
        %v1600 = vmax.f32 %v1568, 0.0
        %v1601 = vmax.f32 %v1569, 0.0
        %v1602 = vmax.f32 %v1570, 0.0
        %v1603 = vmax.f32 %v1571, 0.0
        %v1604 = vmax.f32 %v1572, 0.0
        %v1605 = vmax.f32 %v1573, 0.0
        %v1606 = vmax.f32 %v1574, 0.0
        %v1607 = vmax.f32 %v1575, 0.0
        %v1608 = vmax.f32 %v1576, 0.0
        %v1609 = vmax.f32 %v1577, 0.0
        %v1610 = vpack.c.bf16 %v1579, %v1578
        %v1611 = vpack.c.bf16 %v1581, %v1580
        %v1612 = vpack.c.bf16 %v1583, %v1582
        %v1613 = vpack.c.bf16 %v1585, %v1584
        %v1614 = vpack.c.bf16 %v1587, %v1586
        %v1615 = vpack.c.bf16 %v1589, %v1588
        %v1616 = vpack.c.bf16 %v1591, %v1590
        %v1617 = vpack.c.bf16 %v1593, %v1592
        %v1618 = vpack.c.bf16 %v1595, %v1594
        %v1619 = vpack.c.bf16 %v1597, %v1596
        %v1620 = vpack.c.bf16 %v1599, %v1598
        %v1621 = vpack.c.bf16 %v1601, %v1600
        %v1622 = vpack.c.bf16 %v1603, %v1602
        %v1623 = vpack.c.bf16 %v1605, %v1604
        %v1624 = vpack.c.bf16 %v1607, %v1606
        %v1625 = vpack.c.bf16 %v1609, %v1608
        %v1642 = vunpack.c.l.b16 %v1610
        %v1643 = vunpack.c.h.b16 %v1610
        %v1644 = vunpack.c.l.b16 %v1611
        %v1645 = vunpack.c.h.b16 %v1611
        %v1646 = vunpack.c.l.b16 %v1612
        %v1647 = vunpack.c.h.b16 %v1612
        %v1648 = vunpack.c.l.b16 %v1613
        %v1649 = vunpack.c.h.b16 %v1613
        %v1650 = vunpack.c.l.b16 %v1614
        %v1651 = vunpack.c.h.b16 %v1614
        %v1652 = vunpack.c.l.b16 %v1615
        %v1653 = vunpack.c.h.b16 %v1615
        %v1654 = vunpack.c.l.b16 %v1616
        %v1655 = vunpack.c.h.b16 %v1616
        %v1656 = vunpack.c.l.b16 %v1617
        %v1657 = vunpack.c.h.b16 %v1617
        %v1658 = vunpack.c.l.b16 %v1618
        %v1659 = vunpack.c.h.b16 %v1618
        %v1660 = vunpack.c.l.b16 %v1619
        %v1661 = vunpack.c.h.b16 %v1619
        %v1662 = vunpack.c.l.b16 %v1620
        %v1663 = vunpack.c.h.b16 %v1620
        %v1664 = vunpack.c.l.b16 %v1621
        %v1665 = vunpack.c.h.b16 %v1621
        %v1666 = vunpack.c.l.b16 %v1622
        %v1667 = vunpack.c.h.b16 %v1622
        %v1668 = vunpack.c.l.b16 %v1623
        %v1669 = vunpack.c.h.b16 %v1623
        %v1670 = vunpack.c.l.b16 %v1624
        %v1671 = vunpack.c.h.b16 %v1624
        %v1672 = vunpack.c.l.b16 %v1625
        %v1673 = vunpack.c.h.b16 %v1625
        %v1674 = vpack.c.b16 %v1642, %v1642
        %v1675 = vpack.c.b16 %v1643, %v1643
        %v1676 = vpack.c.b16 %v1644, %v1644
        %v1677 = vpack.c.b16 %v1645, %v1645
        %v1678 = vpack.c.b16 %v1646, %v1646
        %v1679 = vpack.c.b16 %v1647, %v1647
        %v1680 = vpack.c.b16 %v1648, %v1648
        %v1681 = vpack.c.b16 %v1649, %v1649
        %v1682 = vpack.c.b16 %v1650, %v1650
        %v1683 = vpack.c.b16 %v1651, %v1651
        %v1684 = vpack.c.b16 %v1652, %v1652
        %v1685 = vpack.c.b16 %v1653, %v1653
        %v1686 = vpack.c.b16 %v1654, %v1654
        %v1687 = vpack.c.b16 %v1655, %v1655
        %v1688 = vpack.c.b16 %v1656, %v1656
        %v1689 = vpack.c.b16 %v1657, %v1657
        %v1690 = vpack.c.b16 %v1658, %v1658
        %v1691 = vpack.c.b16 %v1659, %v1659
        %v1692 = vpack.c.b16 %v1660, %v1660
        %v1693 = vpack.c.b16 %v1661, %v1661
        %v1694 = vpack.c.b16 %v1662, %v1662
        %v1695 = vpack.c.b16 %v1663, %v1663
        %v1696 = vpack.c.b16 %v1664, %v1664
        %v1697 = vpack.c.b16 %v1665, %v1665
        %v1698 = vpack.c.b16 %v1666, %v1666
        %v1699 = vpack.c.b16 %v1667, %v1667
        %v1700 = vpack.c.b16 %v1668, %v1668
        %v1701 = vpack.c.b16 %v1669, %v1669
        %v1702 = vpack.c.b16 %v1670, %v1670
        %v1703 = vpack.c.b16 %v1671, %v1671
        %v1704 = vpack.c.b16 %v1672, %v1672
        %v1705 = vpack.c.b16 %v1673, %v1673
        %1738 = vst [vmem:[%s589] sm:$0xf] %v1674
        %1739 = vst [vmem:[%s589 + $0x4] sm:$0xf] %v1675
        %1740 = vst [vmem:[%s589 + $0x8] sm:$0xf] %v1676
        %1741 = vst [vmem:[%s589 + $0xc] sm:$0xf] %v1677
        %1742 = vst [vmem:[%s589 + $0x10] sm:$0xf] %v1678
        %1743 = vst [vmem:[%s589 + $0x14] sm:$0xf] %v1679
        %1744 = vst [vmem:[%s589 + $0x18] sm:$0xf] %v1680
        %1745 = vst [vmem:[%s589 + $0x1c] sm:$0xf] %v1681
        %1746 = vst [vmem:[%s589 + $0x20] sm:$0xf] %v1682
        %1747 = vst [vmem:[%s589 + $0x24] sm:$0xf] %v1683
        %1748 = vst [vmem:[%s589 + $0x28] sm:$0xf] %v1684
        %1749 = vst [vmem:[%s589 + $0x2c] sm:$0xf] %v1685
        %1750 = vst [vmem:[%s589 + $0x30] sm:$0xf] %v1686
        %1751 = vst [vmem:[%s589 + $0x34] sm:$0xf] %v1687
        %1752 = vst [vmem:[%s589 + $0x38] sm:$0xf] %v1688
        %1753 = vst [vmem:[%s589 + $0x3c] sm:$0xf] %v1689
        %1754 = vst [vmem:[%s589 + $0x40] sm:$0xf] %v1690
        %1755 = vst [vmem:[%s589 + $0x44] sm:$0xf] %v1691
        %1756 = vst [vmem:[%s589 + $0x48] sm:$0xf] %v1692
        %1757 = vst [vmem:[%s589 + $0x4c] sm:$0xf] %v1693
        %1758 = vst [vmem:[%s589 + $0x50] sm:$0xf] %v1694
        %1759 = vst [vmem:[%s589 + $0x54] sm:$0xf] %v1695
        %1760 = vst [vmem:[%s589 + $0x58] sm:$0xf] %v1696
        %1761 = vst [vmem:[%s589 + $0x5c] sm:$0xf] %v1697
        %1762 = vst [vmem:[%s589 + $0x60] sm:$0xf] %v1698
        %1763 = vst [vmem:[%s589 + $0x64] sm:$0xf] %v1699
        %1764 = vst [vmem:[%s589 + $0x68] sm:$0xf] %v1700
        %1765 = vst [vmem:[%s589 + $0x6c] sm:$0xf] %v1701
        %1766 = vst [vmem:[%s589 + $0x70] sm:$0xf] %v1702
        %1767 = vst [vmem:[%s589 + $0x74] sm:$0xf] %v1703
        %1768 = vst [vmem:[%s589 + $0x78] sm:$0xf] %v1704
        %1769 = vst [vmem:[%s589 + $0x7c] sm:$0xf] %v1705
        %v1770 = vmul.f32 %v1578, %v664
        %v1771 = vmul.f32 %v1579, %v665
        %v1772 = vmul.f32 %v1580, %v664
        %v1773 = vmul.f32 %v1581, %v665
        %v1774 = vmul.f32 %v1582, %v664
        %v1775 = vmul.f32 %v1583, %v665
        %v1776 = vmul.f32 %v1584, %v664
        %v1777 = vmul.f32 %v1585, %v665
        %v1778 = vmul.f32 %v1586, %v664
        %v1779 = vmul.f32 %v1587, %v665
        %v1780 = vmul.f32 %v1588, %v664
        %v1781 = vmul.f32 %v1589, %v665
        %v1782 = vmul.f32 %v1590, %v664
        %v1783 = vmul.f32 %v1591, %v665
        %v1784 = vmul.f32 %v1592, %v664
        %v1785 = vmul.f32 %v1593, %v665
        %v1786 = vmul.f32 %v1594, %v664
        %v1787 = vmul.f32 %v1595, %v665
        %v1788 = vmul.f32 %v1596, %v664
        %v1789 = vmul.f32 %v1597, %v665
        %v1790 = vmul.f32 %v1598, %v664
        %v1791 = vmul.f32 %v1599, %v665
        %v1792 = vmul.f32 %v1600, %v664
        %v1793 = vmul.f32 %v1601, %v665
        %v1794 = vmul.f32 %v1602, %v664
        %v1795 = vmul.f32 %v1603, %v665
        %v1796 = vmul.f32 %v1604, %v664
        %v1797 = vmul.f32 %v1605, %v665
        %v1798 = vmul.f32 %v1606, %v664
        %v1799 = vmul.f32 %v1607, %v665
        %v1800 = vmul.f32 %v1608, %v664
        %v1801 = vmul.f32 %v1609, %v665
        %v1802 = vmul.f32 %v993, %v1770
        %v1803 = vmul.f32 %v997, %v1771
        %v1804 = vmul.f32 %v1004, %v1772
        %v1805 = vmul.f32 %v1008, %v1773
        %v1806 = vmul.f32 %v1015, %v1774
        %v1807 = vmul.f32 %v1019, %v1775
        %v1808 = vmul.f32 %v1026, %v1776
        %v1809 = vmul.f32 %v1030, %v1777
        %v1810 = vmul.f32 %v1037, %v1778
        %v1811 = vmul.f32 %v1041, %v1779
        %v1812 = vmul.f32 %v1048, %v1780
        %v1813 = vmul.f32 %v1052, %v1781
        %v1814 = vmul.f32 %v1059, %v1782
        %v1815 = vmul.f32 %v1063, %v1783
        %v1816 = vmul.f32 %v1070, %v1784
        %v1817 = vmul.f32 %v1074, %v1785
        %v1818 = vmul.f32 %v1081, %v1786
        %v1819 = vmul.f32 %v1085, %v1787
        %v1820 = vmul.f32 %v1092, %v1788
        %v1821 = vmul.f32 %v1096, %v1789
        %v1822 = vmul.f32 %v1103, %v1790
        %v1823 = vmul.f32 %v1107, %v1791
        %v1824 = vmul.f32 %v1114, %v1792
        %v1825 = vmul.f32 %v1118, %v1793
        %v1826 = vmul.f32 %v1125, %v1794
        %v1827 = vmul.f32 %v1129, %v1795
        %v1828 = vmul.f32 %v1136, %v1796
        %v1829 = vmul.f32 %v1140, %v1797
        %v1830 = vmul.f32 %v1147, %v1798
        %v1831 = vmul.f32 %v1151, %v1799
        %v1832 = vmul.f32 %v1158, %v1800
        %v1833 = vmul.f32 %v1162, %v1801
        %v1834 = vadd.f32 %v1802, %v1803
        %v1835 = vrot.slane %v1834, 4
        %v1836 = vadd.f32 %v1834, %v1835
        %v1837 = vrot.slane %v1836, 2
        %v1838 = vadd.f32 %v1836, %v1837
        %v1839 = vrot.slane %v1838, 1
        %v1840 = vadd.f32 %v1838, %v1839
        %v1841 = vadd.f32 %v1804, %v1805
        %v1842 = vrot.slane %v1841, 4
        %v1843 = vadd.f32 %v1841, %v1842
        %v1844 = vrot.slane %v1843, 2
        %v1845 = vadd.f32 %v1843, %v1844
        %v1846 = vrot.slane %v1845, 1
        %v1847 = vadd.f32 %v1845, %v1846
        %v1848 = vadd.f32 %v1806, %v1807
        %v1849 = vrot.slane %v1848, 4
        %v1850 = vadd.f32 %v1848, %v1849
        %v1851 = vrot.slane %v1850, 2
        %v1852 = vadd.f32 %v1850, %v1851
        %v1853 = vrot.slane %v1852, 1
        %v1854 = vadd.f32 %v1852, %v1853
        %v1855 = vadd.f32 %v1808, %v1809
        %v1856 = vrot.slane %v1855, 4
        %v1857 = vadd.f32 %v1855, %v1856
        %v1858 = vrot.slane %v1857, 2
        %v1859 = vadd.f32 %v1857, %v1858
        %v1860 = vrot.slane %v1859, 1
        %v1861 = vadd.f32 %v1859, %v1860
        %v1862 = vadd.f32 %v1810, %v1811
        %v1863 = vrot.slane %v1862, 4
        %v1864 = vadd.f32 %v1862, %v1863
        %v1865 = vrot.slane %v1864, 2
        %v1866 = vadd.f32 %v1864, %v1865
        %v1867 = vrot.slane %v1866, 1
        %v1868 = vadd.f32 %v1866, %v1867
        %v1869 = vadd.f32 %v1812, %v1813
        %v1870 = vrot.slane %v1869, 4
        %v1871 = vadd.f32 %v1869, %v1870
        %v1872 = vrot.slane %v1871, 2
        %v1873 = vadd.f32 %v1871, %v1872
        %v1874 = vrot.slane %v1873, 1
        %v1875 = vadd.f32 %v1873, %v1874
        %v1876 = vadd.f32 %v1814, %v1815
        %v1877 = vrot.slane %v1876, 4
        %v1878 = vadd.f32 %v1876, %v1877
        %v1879 = vrot.slane %v1878, 2
        %v1880 = vadd.f32 %v1878, %v1879
        %v1881 = vrot.slane %v1880, 1
        %v1882 = vadd.f32 %v1880, %v1881
        %v1883 = vadd.f32 %v1816, %v1817
        %v1884 = vrot.slane %v1883, 4
        %v1885 = vadd.f32 %v1883, %v1884
        %v1886 = vrot.slane %v1885, 2
        %v1887 = vadd.f32 %v1885, %v1886
        %v1888 = vrot.slane %v1887, 1
        %v1889 = vadd.f32 %v1887, %v1888
        %v1890 = vadd.f32 %v1818, %v1819
        %v1891 = vrot.slane %v1890, 4
        %v1892 = vadd.f32 %v1890, %v1891
        %v1893 = vrot.slane %v1892, 2
        %v1894 = vadd.f32 %v1892, %v1893
        %v1895 = vrot.slane %v1894, 1
        %v1896 = vadd.f32 %v1894, %v1895
        %v1897 = vadd.f32 %v1820, %v1821
        %v1898 = vrot.slane %v1897, 4
        %v1899 = vadd.f32 %v1897, %v1898
        %v1900 = vrot.slane %v1899, 2
        %v1901 = vadd.f32 %v1899, %v1900
        %v1902 = vrot.slane %v1901, 1
        %v1903 = vadd.f32 %v1901, %v1902
        %v1904 = vadd.f32 %v1822, %v1823
        %v1905 = vrot.slane %v1904, 4
        %v1906 = vadd.f32 %v1904, %v1905
        %v1907 = vrot.slane %v1906, 2
        %v1908 = vadd.f32 %v1906, %v1907
        %v1909 = vrot.slane %v1908, 1
        %v1910 = vadd.f32 %v1908, %v1909
        %v1911 = vadd.f32 %v1824, %v1825
        %v1912 = vrot.slane %v1911, 4
        %v1913 = vadd.f32 %v1911, %v1912
        %v1914 = vrot.slane %v1913, 2
        %v1915 = vadd.f32 %v1913, %v1914
        %v1916 = vrot.slane %v1915, 1
        %v1917 = vadd.f32 %v1915, %v1916
        %v1918 = vadd.f32 %v1826, %v1827
        %v1919 = vrot.slane %v1918, 4
        %v1920 = vadd.f32 %v1918, %v1919
        %v1921 = vrot.slane %v1920, 2
        %v1922 = vadd.f32 %v1920, %v1921
        %v1923 = vrot.slane %v1922, 1
        %v1924 = vadd.f32 %v1922, %v1923
        %v1925 = vadd.f32 %v1828, %v1829
        %v1926 = vrot.slane %v1925, 4
        %v1927 = vadd.f32 %v1925, %v1926
        %v1928 = vrot.slane %v1927, 2
        %v1929 = vadd.f32 %v1927, %v1928
        %v1930 = vrot.slane %v1929, 1
        %v1931 = vadd.f32 %v1929, %v1930
        %v1932 = vadd.f32 %v1830, %v1831
        %v1933 = vrot.slane %v1932, 4
        %v1934 = vadd.f32 %v1932, %v1933
        %v1935 = vrot.slane %v1934, 2
        %v1936 = vadd.f32 %v1934, %v1935
        %v1937 = vrot.slane %v1936, 1
        %v1938 = vadd.f32 %v1936, %v1937
        %v1939 = vadd.f32 %v1832, %v1833
        %v1940 = vrot.slane %v1939, 4
        %v1941 = vadd.f32 %v1939, %v1940
        %v1942 = vrot.slane %v1941, 2
        %v1943 = vadd.f32 %v1941, %v1942
        %v1944 = vrot.slane %v1943, 1
        %v1945 = vadd.f32 %v1943, %v1944
        %p1946 = scmp.eq.s32.totalorder %s42, 0
        // Predicated region
        $region77: #{tpu_custom_call.1} parent=55 // pred_check
          %p1947 = pneg %p1946
        $region78: #{tpu_custom_call.1} parent=55 // pred_check_branch
          %1949 = sbr.rel (%p1947) target = $region80
        $region79: #{tpu_custom_call.1} parent=55 // pred_region
          %vm1966 = vcmask 1041409
          %v1967 = vsel %vm1966, %v1847, %v1840
          %vm1968 = vcmask 1042434
          %v1969 = vsel %vm1968, %v1854, %v1967
          %vm1970 = vcmask 1043459
          %v1971 = vsel %vm1970, %v1861, %v1969
          %vm1972 = vcmask 1044484
          %v1973 = vsel %vm1972, %v1868, %v1971
          %vm1974 = vcmask 1045509
          %v1975 = vsel %vm1974, %v1875, %v1973
          %vm1976 = vcmask 1046534
          %v1977 = vsel %vm1976, %v1882, %v1975
          %vm1978 = vcmask 1047559
          %v1979 = vsel %vm1978, %v1889, %v1977
          %v1980 = vsel %vm1966, %v1903, %v1896
          %v1981 = vsel %vm1968, %v1910, %v1980
          %v1982 = vsel %vm1970, %v1917, %v1981
          %v1983 = vsel %vm1972, %v1924, %v1982
          %v1984 = vsel %vm1974, %v1931, %v1983
          %v1985 = vsel %vm1976, %v1938, %v1984
          %v1986 = vsel %vm1978, %v1945, %v1985
          %1989 = vst [vmem:[%s596] sm:$0xff] %v1979
          %1990 = vst [vmem:[%s596 + $0x8] sm:$0xff] %v1986
        $region80: #{tpu_custom_call.1} parent=55 // pred_fallthru
          _
        %p1991 = scmp.gt.s32.totalorder %s42, 0
        // Predicated region
        $region81: #{tpu_custom_call.1} parent=55 // pred_check
          %p1992 = pneg %p1991
        $region82: #{tpu_custom_call.1} parent=55 // pred_check_branch
          %1994 = sbr.rel (%p1992) target = $region84
        $region83: #{tpu_custom_call.1} parent=55 // pred_region
          %v1995 = vld [vmem:[%s596] sm:$0xff]
          %v1996 = vld [vmem:[%s596 + $0x8] sm:$0xff]
          %vm2013 = vcmask 1041409
          %v2014 = vsel %vm2013, %v1847, %v1840
          %vm2015 = vcmask 1042434
          %v2016 = vsel %vm2015, %v1854, %v2014
          %vm2017 = vcmask 1043459
          %v2018 = vsel %vm2017, %v1861, %v2016
          %vm2019 = vcmask 1044484
          %v2020 = vsel %vm2019, %v1868, %v2018
          %vm2021 = vcmask 1045509
          %v2022 = vsel %vm2021, %v1875, %v2020
          %vm2023 = vcmask 1046534
          %v2024 = vsel %vm2023, %v1882, %v2022
          %vm2025 = vcmask 1047559
          %v2026 = vsel %vm2025, %v1889, %v2024
          %v2027 = vsel %vm2013, %v1903, %v1896
          %v2028 = vsel %vm2015, %v1910, %v2027
          %v2029 = vsel %vm2017, %v1917, %v2028
          %v2030 = vsel %vm2019, %v1924, %v2029
          %v2031 = vsel %vm2021, %v1931, %v2030
          %v2032 = vsel %vm2023, %v1938, %v2031
          %v2033 = vsel %vm2025, %v1945, %v2032
          %v2036 = vadd.f32 %v1995, %v2026
          %v2037 = vadd.f32 %v1996, %v2033
          %2038 = vst [vmem:[%s596] sm:$0xff] %v2036
          %2039 = vst [vmem:[%s596 + $0x8] sm:$0xff] %v2037
        $region84: #{tpu_custom_call.1} parent=55 // pred_fallthru
          _
        // Predicated region
        $region85: #{tpu_custom_call.1} parent=55 // pred_check
          %p2040 = pneg %p1946
        $region86: #{tpu_custom_call.1} parent=55 // pred_check_branch
          %2042 = sbr.rel (%p2040) target = $region88
        $region87: #{tpu_custom_call.1} parent=55 // pred_region
          %v2043 = vld [vmem:[%s596] sm:$0xff]
          %v2044 = vld [vmem:[%s596 + $0x8] sm:$0xff]
          %v2045 = vld [vmem:[%s622] sm:$0xff]
          %v2046 = vld [vmem:[%s622 + $0x8] sm:$0xff]
          %2048 = vset.pattern.permute.xlu0 0
          %2049 = vperm.xlu0 %2048, %v2045
          %v2050 = vpop.permute.xlu0 %2049
          %2053 = vset.pattern.permute.xlu0 0
          %2054 = vperm.xlu0 %2053, %v2046
          %v2055 = vpop.permute.xlu0 %2054
          %v2057 = vmul.f32 %v2043, %v2050
          %v2058 = vmul.f32 %v2044, %v2055
          %2059 = vst [vmem:[%s596] sm:$0xff] %v2057
          %2060 = vst [vmem:[%s596 + $0x8] sm:$0xff] %v2058
        $region88: #{tpu_custom_call.1} parent=55 // pred_fallthru
          _
        %s2061 = sand.u32 %s294, 1
        %s2062 = scalar_lea.sflag [#allocation4], %s2061
        %s2063 = sand.u32 %s294, 1
        %s2064 = smul.addr %s2063, 128
        %s2065 = scalar_lea.vmem [#allocation11], %s2064
        %s2066 = sand.u32 %s322, 1
        %s2067 = scalar_lea.sflag [#allocation13], %s2066
        %s2068 = sand.u32 %s322, 1
        %s2069 = smul.addr %s2068, 16
        %s2070 = scalar_lea.vmem [#allocation12], %s2069
        // Predicated region
        $region89: #{tpu_custom_call.1} parent=55 // pred_check
          %p2071 = pneg %p304
        $region90: #{tpu_custom_call.1} parent=55 // pred_check_branch
          %2073 = sbr.rel (%p2071) target = $region92
        $region91: #{tpu_custom_call.1} parent=55 // pred_region
          %s2074 = smul.u32 16, %s41
          %s2075 = smul.u32 2, %s42
          %s2077 = ssub.s32 2048, 2048
          %2078 = vsyncadd %s2062, %s2077
          %s2079 = smul.addr %s2074, 2
          %s2080 = sadd.s32 %s2075, %s2079
          %s2081 = smul.addr %s40, 32
          %s2082 = sadd.s32 %s2080, %s2081
          %s2083 = smul.addr %s2082, 64
          %s2084 = scalar_lea.hbm %s9, %s2083
          %s2085 = sshll.u32 %s2065, 4
          %s2086 = int_to_ptr.vmem [resolvable:$true] %s2085
          %2091 = dma.vmem_to_hbm [thread:$0]  %s2086, 2048, %s2084, %s2062, 64, 64, 4
        $region92: #{tpu_custom_call.1} parent=55 // pred_fallthru
          _
        // Predicated region
        $region93: #{tpu_custom_call.1} parent=55 // pred_check
          %p2092 = pneg %p332
        $region94: #{tpu_custom_call.1} parent=55 // pred_check_branch
          %2094 = sbr.rel (%p2092) target = $region96
        $region95: #{tpu_custom_call.1} parent=55 // pred_region
          %s2095 = smul.u32 2, %s41
          %s2097 = ssub.s32 256, 256
          %2098 = vsyncadd %s2067, %s2097
          %s2099 = smul.addr %s40, 2
          %s2100 = sadd.s32 %s2095, %s2099
          %s2101 = smul.addr %s2100, 128
          %s2102 = scalar_lea.hbm %s10, %s2101
          %s2103 = sshll.u32 %s2070, 4
          %s2104 = int_to_ptr.vmem [resolvable:$true] %s2103
          %2109 = dma.vmem_to_hbm [thread:$0]  %s2104, 256, %s2102, %s2067, 128, 128, 8
        $region96: #{tpu_custom_call.1} parent=55 // pred_fallthru
          _
      $region56: #{tpu_custom_call.1} parent=5 // pred_fallthru
        _
      %p2110 = scmp.le.s32.totalorder 2, %s30
      // Predicated region
      $region97: #{tpu_custom_call.1} parent=5 // pred_check
        %p2111 = pneg %p2110
      $region98: #{tpu_custom_call.1} parent=5 // pred_check_branch
        %2113 = sbr.rel (%p2111) target = $region100
      $region99: #{tpu_custom_call.1} parent=5 // pred_region
        %s2114 = ssub.s32 %s30, 2
        // Predicated region
        $region101: #{tpu_custom_call.1} parent=99 // pred_check
          %p2115 = pneg %p310
        $region102: #{tpu_custom_call.1} parent=99 // pred_check_branch
          %2117 = sbr.rel (%p2115) target = $region104
        $region103: #{tpu_custom_call.1} parent=99 // pred_region
          %s2118 = sand.u32 %s295, 1
          %s2119 = scalar_lea.sflag [#allocation4], %s2118
          %s2120 = sand.u32 %s295, 1
          %s2121 = smul.addr %s2120, 128
          %s2122 = scalar_lea.vmem [#allocation11], %s2121
          %2123 = dma.done %s2119, 2048
        $region104: #{tpu_custom_call.1} parent=99 // pred_fallthru
          _
        // Predicated region
        $region105: #{tpu_custom_call.1} parent=99 // pred_check
          %p2124 = pneg %p338
        $region106: #{tpu_custom_call.1} parent=99 // pred_check_branch
          %2126 = sbr.rel (%p2124) target = $region108
        $region107: #{tpu_custom_call.1} parent=99 // pred_region
          %s2127 = sand.u32 %s323, 1
          %s2128 = scalar_lea.sflag [#allocation13], %s2127
          %s2129 = sand.u32 %s323, 1
          %s2130 = smul.addr %s2129, 16
          %s2131 = scalar_lea.vmem [#allocation12], %s2130
          %2132 = dma.done %s2128, 256
        $region108: #{tpu_custom_call.1} parent=99 // pred_fallthru
          _
      $region100: #{tpu_custom_call.1} parent=5 // pred_fallthru
        _
    $region6: #{tpu_custom_call.1} parent=1 // loop_footer
      %s34 = sadd.s32 1, %s30
    $region7: #{tpu_custom_call.1} parent=1 // loop_footer_branch
      %29 = sbr.rel target = $region3
    $region8: #{tpu_custom_call.1} parent=1 // loop_exit
      _
    %2133 = vsyncpa [#allocation3], 1
    %s2134 = scalar_lea.sflag [#allocation3], 1
    %2135 = vsyncpa %s2134, 1
    %2136 = vsyncpa [#allocation6], 1
    %s2137 = scalar_lea.sflag [#allocation6], 1
    %2138 = vsyncpa %s2137, 1
    %2139 = vsyncpa [#allocation9], 1
    %2140 = vsyncpa [#allocation4], 1
    %s2141 = scalar_lea.sflag [#allocation4], 1
    %2142 = vsyncpa %s2141, 1
    %2143 = vsyncpa [#allocation13], 1
    %s2144 = scalar_lea.sflag [#allocation13], 1
    %2145 = vsyncpa %s2144, 1

</llo_original>
